<compile_context>
chip_gen: v7x
topology: tpu7x:2x2x1
jax: 0.10.0
libtpu: 0.0.40
codegen_flags: <defaults>
</compile_context>

<pallas_src>
import functools

import numpy as np
import jax
import jax.numpy as jnp
from jax.experimental import pallas as pl
from jax.experimental.pallas import tpu as pltpu

EDGE_THRESHOLD = 5

# Neighbor offsets (dh, dw), grouped by dh so the row-roll is computed once and reused.
_NEIGHBOR_OFFSETS = (
    (-1, (-1, 0, 1)),
    (0, (-1, 1)),
    (1, (-1, 0, 1)),
)

# Which second-derivative accumulator each neighbor feeds, and with what sign.
#   dii filter [[0,1,0],[0,-2,0],[0,1,0]]          -> rows -1,+1 at dw=0
#   djj filter [[0,0,0],[1,-2,1],[0,0,0]]          -> cols -1,+1 at dh=0
#   dij filter 0.25*[[1,0,-1],[0,0,0],[-1,0,1]]    -> the 4 corners (0.25 applied once at end)
_DERIV_TAP = {
    (-1, 0): ("ii", 1.0), (1, 0): ("ii", 1.0),
    (0, -1): ("jj", 1.0), (0, 1): ("jj", 1.0),
    (-1, -1): ("ij", 1.0), (1, 1): ("ij", 1.0),
    (-1, 1): ("ij", -1.0), (1, -1): ("ij", -1.0),
}


# --------------------------- shared kernel body ---------------------------
def _detect_body(x, cmax, col, out_ref, *, h, w, edge_threshold):
    """x: (TB, TC, H*W) f32; cmax: (TB, 1, H*W) f32; col: (1, H*W) int32."""
    hw = x.shape[-1]

    is_depth_wise_max = x == cmax

    # Boundary masks, built once and shared by every neighbor offset.  Row masks need only
    # the flat index; column masks use the precomputed per-position column index (no
    # per-element div/mod in the kernel).
    flat = jax.lax.broadcasted_iota(jnp.int32, (1, hw), 1)
    row_ok = {-1: flat >= w, 1: flat < (h - 1) * w}
    col_ok = {-1: col >= 1, 1: col < w - 1}
    masks = {}
    for dh, dws in _NEIGHBOR_OFFSETS:
        for dw in dws:
            if dh == 0:
                masks[(dh, dw)] = col_ok[dw]
            elif dw == 0:
                masks[(dh, dw)] = row_ok[dh]
            else:
                masks[(dh, dw)] = row_ok[dh] & col_ok[dw]

    neg_inf = jnp.float32(-jnp.inf)
    zero = jnp.float32(0.0)

    local_max = x
    m2x = -2.0 * x            # hoisted, shared by dii and djj
    dii = m2x
    djj = m2x
    dij_acc = None

    # Single fused pass over the 8 neighbor offsets: 8 lane-rolls total (the row roll is
    # reused across column offsets); each rolled view feeds BOTH the -inf-padded 3x3
    # max-pool tap and its zero-padded second-derivative tap.
    for dh, dws in _NEIGHBOR_OFFSETS:
        xh = x if dh == 0 else pltpu.roll(x, shift=(-dh * w) % hw, axis=2)
        for dw in dws:
            y = xh if dw == 0 else pltpu.roll(xh, shift=(-dw) % hw, axis=2)
            valid = masks[(dh, dw)]

            # 3x3 max-pool tap (stride 1, padding 1, pad value -inf).
            local_max = jnp.maximum(local_max, jnp.where(valid, y, neg_inf))

            # Zero-padded second-derivative tap.
            y0 = jnp.where(valid, y, zero)
            which, sign = _DERIV_TAP[(dh, dw)]
            if which == "ii":
                dii = dii + y0
            elif which == "jj":
                djj = djj + y0
            else:
                if dij_acc is None:
                    dij_acc = y0                  # first corner is (-1,-1), sign +1
                elif sign > 0:
                    dij_acc = dij_acc + y0
                else:
                    dij_acc = dij_acc - y0

    is_local_max = x == local_max
    dij = 0.25 * dij_acc

    det = dii * djj - dij * dij
    tr = dii + djj
    threshold = (edge_threshold + 1) ** 2 / edge_threshold
    is_not_edge = (tr * tr <= threshold * det) & (det > 0)

    detected = is_depth_wise_max & is_local_max & is_not_edge
    out_ref[...] = detected.astype(out_ref.dtype)


# ------------------------------- kernels ----------------------------------
def fused_detection_kernel(x_ref, col_ref, out_ref, *, h, w, edge_threshold):
    """Single pass: channel max computed in-kernel (x read from HBM exactly once)."""
    x = x_ref[...]                                   # (TB, C, H*W) f32
    cmax = jnp.max(x, axis=1, keepdims=True)         # (TB, 1, H*W)
    _detect_body(x, cmax, col_ref[...], out_ref, h=h, w=w, edge_threshold=edge_threshold)


def channel_max_kernel(x_ref, cmax_ref):
    """Two-pass fallback, pass 1: channel max accumulated across channel tiles."""
    @pl.when(pl.program_id(1) == 0)
    def _():
        cmax_ref[...] = jnp.full(cmax_ref.shape, -jnp.inf, dtype=cmax_ref.dtype)

    cmax_ref[...] = jnp.maximum(cmax_ref[...],
                                jnp.max(x_ref[...], axis=1, keepdims=True))


def tiled_detection_kernel(x_ref, cmax_ref, col_ref, out_ref, *, h, w, edge_threshold):
    """Two-pass fallback, pass 2: detection on one (batch, channel-tile) slab."""
    _detect_body(x_ref[...], cmax_ref[...], col_ref[...], out_ref,
                 h=h, w=w, edge_threshold=edge_threshold)


# ------------------------------ planning ----------------------------------
def _vmem_capacity_bytes():
    try:
        return int(pltpu.get_tpu_info().vmem_capacity_bytes)
    except Exception:
        return 64 * 1024 * 1024          # conservative (v7x-sized) default


def _plan(b, c, hw):
    """Pick fused vs two-pass mode, batch/channel tile sizes and the VMEM limit.

    The f32 input slab of one grid step is budgeted so the ~10x in-kernel temporary
    expansion (x, cmax, local_max, dii/djj/dij, rolled views, masks, detected) plus the
    2x double-buffered input DMA and the output stay well inside scoped VMEM.
    """
    vmem_cap = _vmem_capacity_bytes()
    if vmem_cap <= 64 * 1024 * 1024:                 # v7x-class: 64 MiB physical VMEM
        tile_budget = 3 * 1024 * 1024 // 2           # 1.5 MiB f32 slab per grid step
        vmem_limit = 28 * 1024 * 1024
    else:                                            # v5e / v6e: 128 MiB physical VMEM
        tile_budget = 4 * 1024 * 1024
        vmem_limit = 64 * 1024 * 1024

    plane_bytes = hw * 4                             # one (batch, channel) plane, f32
    full_c_bytes = c * plane_bytes

    if full_c_bytes <= tile_budget:
        # Fused single pass.  Block over batch so each grid step moves a decent slab
        # (amortizes the ~0.35 us per-step overhead), stopping once ~1 MiB is reached so
        # larger problems keep >=2 grid steps for megacore.
        step_target = min(tile_budget, 1024 * 1024)
        tb = 1
        for d in range(1, b + 1):
            if b % d:
                continue
            if d * full_c_bytes > tile_budget:
                break
            tb = d
            if d * full_c_bytes >= step_target:
                break
        return dict(mode="fused", tb=tb, tc=c, vmem_limit=vmem_limit)

    # Two-pass channel-tiled fallback (very large C*H*W).  Prefer channel tiles that are
    # multiples of 32 (int8 output sublane packing), then 8 (f32 sublane tiling).
    tc = None
    for pref in (32, 8, 1):
        for cand in range(c - 1, 0, -1):
            if c % cand == 0 and cand % pref == 0 and cand * plane_bytes <= tile_budget:
                tc = cand
                break
        if tc is not None:
            break
    if tc is None:
        # TODO(synk): H-halo spatial tiling for huge planes; until then use a full-C block.
        return dict(mode="fused", tb=1, tc=c, vmem_limit=vmem_limit)
    return dict(mode="two_pass", tb=1, tc=tc, vmem_limit=vmem_limit)


# ------------------------------- wrapper -----------------------------------
def _hard_detection_impl(xf, col_idx, h, w, plan, out_dtype, edge_threshold):
    b, c, hw = xf.shape
    vmem_limit = plan["vmem_limit"]

    if plan["mode"] == "fused":
        tb = plan["tb"]
        kernel = functools.partial(fused_detection_kernel, h=h, w=w,
                                   edge_threshold=edge_threshold)
        # TODO(synk): evaluate pltpu.CORE_PARALLEL on this axis for v7x's 2 TensorCores.
        return pl.pallas_call(
            kernel,
            out_shape=jax.ShapeDtypeStruct((b, c, hw), out_dtype),
            grid=(b // tb,),
            in_specs=[pl.BlockSpec((tb, c, hw), lambda i: (i, 0, 0)),
                      pl.BlockSpec((1, hw), lambda i: (0, 0))],
            out_specs=pl.BlockSpec((tb, c, hw), lambda i: (i, 0, 0)),
            compiler_params=pltpu.CompilerParams(
                dimension_semantics=("parallel",),
                vmem_limit_bytes=vmem_limit),
        )(xf, col_idx)

    # Two-pass channel-tiled path (very large C*H*W only).
    tc = plan["tc"]
    n_c = c // tc

    cmax = pl.pallas_call(
        channel_max_kernel,
        out_shape=jax.ShapeDtypeStruct((b, 1, hw), jnp.float32),
        grid=(b, n_c),
        in_specs=[pl.BlockSpec((1, tc, hw), lambda i, j: (i, j, 0))],
        out_specs=pl.BlockSpec((1, 1, hw), lambda i, j: (i, 0, 0)),
        compiler_params=pltpu.CompilerParams(
            dimension_semantics=("parallel", "arbitrary"),
            vmem_limit_bytes=vmem_limit),
    )(xf)

    kernel = functools.partial(tiled_detection_kernel, h=h, w=w,
                               edge_threshold=edge_threshold)
    return pl.pallas_call(
        kernel,
        out_shape=jax.ShapeDtypeStruct((b, c, hw), out_dtype),
        grid=(b, n_c),
        in_specs=[pl.BlockSpec((1, tc, hw), lambda i, j: (i, j, 0)),
                  pl.BlockSpec((1, 1, hw), lambda i, j: (i, 0, 0)),
                  pl.BlockSpec((1, hw), lambda i, j: (0, 0))],
        out_specs=pl.BlockSpec((1, tc, hw), lambda i, j: (i, j, 0)),
        compiler_params=pltpu.CompilerParams(
            dimension_semantics=("parallel", "parallel"),
            vmem_limit_bytes=vmem_limit),
    )(xf, cmax, col_idx)


def hard_detection(x, edge_threshold=EDGE_THRESHOLD):
    b, c, h, w = x.shape
    hw = h * w
    # Lane-dense layout: merge (H, W) into one contiguous trailing axis (free reshape) so
    # the last (lane) dim of every block is H*W instead of W.
    xf = x.astype(jnp.float32).reshape(b, c, hw)
    col_idx = jnp.tile(jnp.arange(w, dtype=jnp.int32), h).reshape(1, hw)

    plan = _plan(b, c, hw)
    try:
        # Emit the boolean mask directly from the kernel (no extra astype pass over the
        # whole output array).
        out = _hard_detection_impl(xf, col_idx, h, w, plan, jnp.bool_, edge_threshold)
        out = jax.block_until_ready(out)
    except Exception:
        # TODO(synk): drop this fallback once bool VMEM outputs are supported everywhere.
        out = _hard_detection_impl(xf, col_idx, h, w, plan, jnp.int8,
                                   edge_threshold).astype(jnp.bool_)
    return out.reshape(b, c, h, w)


# ---------------- pure-JAX reference (same math, no Pallas) ----------------
def _shift_ref(x, dh, dw, pad_val):
    h, w = x.shape[-2], x.shape[-1]
    xp = jnp.pad(x, ((0, 0), (0, 0), (1, 1), (1, 1)), constant_values=pad_val)
    return xp[:, :, 1 + dh:1 + dh + h, 1 + dw:1 + dw + w]


def hard_detection_reference(x, edge_threshold=EDGE_THRESHOLD):
    x = x.astype(jnp.float32)
    dmax = jnp.max(x, axis=1, keepdims=True)
    is_depth_wise_max = x == dmax
    local_max = x
    for dh in (-1, 0, 1):
        for dw in (-1, 0, 1):
            if dh == 0 and dw == 0:
                continue
            local_max = jnp.maximum(local_max, _shift_ref(x, dh, dw, -jnp.inf))
    is_local_max = x == local_max
    dii = _shift_ref(x, -1, 0, 0.0) - 2.0 * x + _shift_ref(x, 1, 0, 0.0)
    djj = _shift_ref(x, 0, -1, 0.0) - 2.0 * x + _shift_ref(x, 0, 1, 0.0)
    dij = 0.25 * (_shift_ref(x, -1, -1, 0.0) - _shift_ref(x, -1, 1, 0.0)
                  - _shift_ref(x, 1, -1, 0.0) + _shift_ref(x, 1, 1, 0.0))
    det = dii * djj - dij * dij
    tr = dii + djj
    threshold = (edge_threshold + 1) ** 2 / edge_threshold
    is_not_edge = (tr * tr <= threshold * det) & (det > 0)
    return is_depth_wise_max & is_local_max & is_not_edge


if __name__ == "__main__":
    key = jax.random.PRNGKey(0)
    x = jax.random.normal(key, (2, 4, 16, 16), dtype=jnp.float32)

    detected = jax.block_until_ready(hard_detection(x))
    ref = jax.block_until_ready(hard_detection_reference(x))

    assert detected.shape == (2, 4, 16, 16)
    assert detected.dtype == jnp.bool_
    assert np.array_equal(np.asarray(detected), np.asarray(ref)), "mismatch vs reference"

    print("KERNEL_OK")
</pallas_src>

<mosaic_0001>
module attributes {stable_mosaic.version = 11 : i64} {
  func.func @fused_detection_kernel(%arg0: i32, %arg1: memref<2x4x256xf32, #tpu.memory_space<vmem>>, %arg2: memref<1x256xi32, #tpu.memory_space<vmem>>, %arg3: memref<2x4x256xi32, #tpu.memory_space<vmem>>) attributes {dimension_semantics = [#tpu.dimension_semantics<parallel>], iteration_bounds = array<i64: 1>, scalar_prefetch = 0 : i64, scratch_operands = 0 : i64, tpu.core_type = #tpu.core_type<tc>, window_params = [{transform_indices = @transform_0, window_bounds = array<i64: 2, 4, 256>}, {pipeline_mode = #tpu.pipeline_mode<synchronous>, transform_indices = @transform_1, window_bounds = array<i64: 1, 256>}, {transform_indices = @transform_2, window_bounds = array<i64: 2, 4, 256>}]} {
    %c0 = arith.constant 0 : index
    %c0_0 = arith.constant 0 : index
    %c0_1 = arith.constant 0 : index
    %0 = vector.load %arg1[%c0, %c0_0, %c0_1] : memref<2x4x256xf32, #tpu.memory_space<vmem>>, vector<2x4x256xf32>
    %cst = arith.constant dense<0xFF800000> : vector<2x256xf32>
    %1 = vector.multi_reduction <maximumf>, %0, %cst [1] : vector<2x4x256xf32> to vector<2x256xf32>
    %2 = vector.shape_cast %1 : vector<2x256xf32> to vector<2x1x256xf32>
    %c0_2 = arith.constant 0 : index
    %c0_3 = arith.constant 0 : index
    %3 = vector.load %arg2[%c0_2, %c0_3] : memref<1x256xi32, #tpu.memory_space<vmem>>, vector<1x256xi32>
    %4 = vector.broadcast %2 : vector<2x1x256xf32> to vector<2x4x256xf32>
    %5 = arith.cmpf oeq, %0, %4 : vector<2x4x256xf32>
    %6 = tpu.iota {dimensions = array<i32: 1>} : vector<1x256xi32>
    %c16_i32 = arith.constant 16 : i32
    %7 = vector.broadcast %c16_i32 : i32 to vector<1x256xi32>
    %8 = arith.cmpi sge, %6, %7 : vector<1x256xi32>
    %c240_i32 = arith.constant 240 : i32
    %9 = vector.broadcast %c240_i32 : i32 to vector<1x256xi32>
    %10 = arith.cmpi slt, %6, %9 : vector<1x256xi32>
    %c1_i32 = arith.constant 1 : i32
    %11 = vector.broadcast %c1_i32 : i32 to vector<1x256xi32>
    %12 = arith.cmpi sge, %3, %11 : vector<1x256xi32>
    %c15_i32 = arith.constant 15 : i32
    %13 = vector.broadcast %c15_i32 : i32 to vector<1x256xi32>
    %14 = arith.cmpi slt, %3, %13 : vector<1x256xi32>
    %15 = arith.andi %8, %12 : vector<1x256xi1>
    %16 = arith.andi %8, %14 : vector<1x256xi1>
    %17 = arith.andi %10, %12 : vector<1x256xi1>
    %18 = arith.andi %10, %14 : vector<1x256xi1>
    %cst_4 = arith.constant -2.000000e+00 : f32
    %19 = vector.broadcast %cst_4 : f32 to vector<2x4x256xf32>
    %20 = arith.mulf %19, %0 : vector<2x4x256xf32>
    %c16_i32_5 = arith.constant 16 : i32
    %21 = tpu.dynamic_rotate %0 by %c16_i32_5 dim 2 : vector<2x4x256xf32>, i32 -> vector<2x4x256xf32>
    %c1_i32_6 = arith.constant 1 : i32
    %22 = tpu.dynamic_rotate %21 by %c1_i32_6 dim 2 : vector<2x4x256xf32>, i32 -> vector<2x4x256xf32>
    %cst_7 = arith.constant 0xFF800000 : f32
    %23 = vector.shape_cast %15 : vector<1x256xi1> to vector<1x1x256xi1>
    %24 = vector.broadcast %23 : vector<1x1x256xi1> to vector<2x4x256xi1>
    %25 = vector.broadcast %cst_7 : f32 to vector<2x4x256xf32>
    %26 = arith.select %24, %22, %25 : vector<2x4x256xi1>, vector<2x4x256xf32>
    %27 = arith.maximumf %0, %26 : vector<2x4x256xf32>
    %cst_8 = arith.constant 0.000000e+00 : f32
    %28 = vector.shape_cast %15 : vector<1x256xi1> to vector<1x1x256xi1>
    %29 = vector.broadcast %28 : vector<1x1x256xi1> to vector<2x4x256xi1>
    %30 = vector.broadcast %cst_8 : f32 to vector<2x4x256xf32>
    %31 = arith.select %29, %22, %30 : vector<2x4x256xi1>, vector<2x4x256xf32>
    %cst_9 = arith.constant 0xFF800000 : f32
    %32 = vector.shape_cast %8 : vector<1x256xi1> to vector<1x1x256xi1>
    %33 = vector.broadcast %32 : vector<1x1x256xi1> to vector<2x4x256xi1>
    %34 = vector.broadcast %cst_9 : f32 to vector<2x4x256xf32>
    %35 = arith.select %33, %21, %34 : vector<2x4x256xi1>, vector<2x4x256xf32>
    %36 = arith.maximumf %27, %35 : vector<2x4x256xf32>
    %cst_10 = arith.constant 0.000000e+00 : f32
    %37 = vector.shape_cast %8 : vector<1x256xi1> to vector<1x1x256xi1>
    %38 = vector.broadcast %37 : vector<1x1x256xi1> to vector<2x4x256xi1>
    %39 = vector.broadcast %cst_10 : f32 to vector<2x4x256xf32>
    %40 = arith.select %38, %21, %39 : vector<2x4x256xi1>, vector<2x4x256xf32>
    %41 = arith.addf %20, %40 : vector<2x4x256xf32>
    %c255_i32 = arith.constant 255 : i32
    %42 = tpu.dynamic_rotate %21 by %c255_i32 dim 2 : vector<2x4x256xf32>, i32 -> vector<2x4x256xf32>
    %cst_11 = arith.constant 0xFF800000 : f32
    %43 = vector.shape_cast %16 : vector<1x256xi1> to vector<1x1x256xi1>
    %44 = vector.broadcast %43 : vector<1x1x256xi1> to vector<2x4x256xi1>
    %45 = vector.broadcast %cst_11 : f32 to vector<2x4x256xf32>
    %46 = arith.select %44, %42, %45 : vector<2x4x256xi1>, vector<2x4x256xf32>
    %47 = arith.maximumf %36, %46 : vector<2x4x256xf32>
    %cst_12 = arith.constant 0.000000e+00 : f32
    %48 = vector.shape_cast %16 : vector<1x256xi1> to vector<1x1x256xi1>
    %49 = vector.broadcast %48 : vector<1x1x256xi1> to vector<2x4x256xi1>
    %50 = vector.broadcast %cst_12 : f32 to vector<2x4x256xf32>
    %51 = arith.select %49, %42, %50 : vector<2x4x256xi1>, vector<2x4x256xf32>
    %52 = arith.subf %31, %51 : vector<2x4x256xf32>
    %c1_i32_13 = arith.constant 1 : i32
    %53 = tpu.dynamic_rotate %0 by %c1_i32_13 dim 2 : vector<2x4x256xf32>, i32 -> vector<2x4x256xf32>
    %cst_14 = arith.constant 0xFF800000 : f32
    %54 = vector.shape_cast %12 : vector<1x256xi1> to vector<1x1x256xi1>
    %55 = vector.broadcast %54 : vector<1x1x256xi1> to vector<2x4x256xi1>
    %56 = vector.broadcast %cst_14 : f32 to vector<2x4x256xf32>
    %57 = arith.select %55, %53, %56 : vector<2x4x256xi1>, vector<2x4x256xf32>
    %58 = arith.maximumf %47, %57 : vector<2x4x256xf32>
    %cst_15 = arith.constant 0.000000e+00 : f32
    %59 = vector.shape_cast %12 : vector<1x256xi1> to vector<1x1x256xi1>
    %60 = vector.broadcast %59 : vector<1x1x256xi1> to vector<2x4x256xi1>
    %61 = vector.broadcast %cst_15 : f32 to vector<2x4x256xf32>
    %62 = arith.select %60, %53, %61 : vector<2x4x256xi1>, vector<2x4x256xf32>
    %63 = arith.addf %20, %62 : vector<2x4x256xf32>
    %c255_i32_16 = arith.constant 255 : i32
    %64 = tpu.dynamic_rotate %0 by %c255_i32_16 dim 2 : vector<2x4x256xf32>, i32 -> vector<2x4x256xf32>
    %cst_17 = arith.constant 0xFF800000 : f32
    %65 = vector.shape_cast %14 : vector<1x256xi1> to vector<1x1x256xi1>
    %66 = vector.broadcast %65 : vector<1x1x256xi1> to vector<2x4x256xi1>
    %67 = vector.broadcast %cst_17 : f32 to vector<2x4x256xf32>
    %68 = arith.select %66, %64, %67 : vector<2x4x256xi1>, vector<2x4x256xf32>
    %69 = arith.maximumf %58, %68 : vector<2x4x256xf32>
    %cst_18 = arith.constant 0.000000e+00 : f32
    %70 = vector.shape_cast %14 : vector<1x256xi1> to vector<1x1x256xi1>
    %71 = vector.broadcast %70 : vector<1x1x256xi1> to vector<2x4x256xi1>
    %72 = vector.broadcast %cst_18 : f32 to vector<2x4x256xf32>
    %73 = arith.select %71, %64, %72 : vector<2x4x256xi1>, vector<2x4x256xf32>
    %74 = arith.addf %63, %73 : vector<2x4x256xf32>
    %c240_i32_19 = arith.constant 240 : i32
    %75 = tpu.dynamic_rotate %0 by %c240_i32_19 dim 2 : vector<2x4x256xf32>, i32 -> vector<2x4x256xf32>
    %c1_i32_20 = arith.constant 1 : i32
    %76 = tpu.dynamic_rotate %75 by %c1_i32_20 dim 2 : vector<2x4x256xf32>, i32 -> vector<2x4x256xf32>
    %cst_21 = arith.constant 0xFF800000 : f32
    %77 = vector.shape_cast %17 : vector<1x256xi1> to vector<1x1x256xi1>
    %78 = vector.broadcast %77 : vector<1x1x256xi1> to vector<2x4x256xi1>
    %79 = vector.broadcast %cst_21 : f32 to vector<2x4x256xf32>
    %80 = arith.select %78, %76, %79 : vector<2x4x256xi1>, vector<2x4x256xf32>
    %81 = arith.maximumf %69, %80 : vector<2x4x256xf32>
    %cst_22 = arith.constant 0.000000e+00 : f32
    %82 = vector.shape_cast %17 : vector<1x256xi1> to vector<1x1x256xi1>
    %83 = vector.broadcast %82 : vector<1x1x256xi1> to vector<2x4x256xi1>
    %84 = vector.broadcast %cst_22 : f32 to vector<2x4x256xf32>
    %85 = arith.select %83, %76, %84 : vector<2x4x256xi1>, vector<2x4x256xf32>
    %86 = arith.subf %52, %85 : vector<2x4x256xf32>
    %cst_23 = arith.constant 0xFF800000 : f32
    %87 = vector.shape_cast %10 : vector<1x256xi1> to vector<1x1x256xi1>
    %88 = vector.broadcast %87 : vector<1x1x256xi1> to vector<2x4x256xi1>
    %89 = vector.broadcast %cst_23 : f32 to vector<2x4x256xf32>
    %90 = arith.select %88, %75, %89 : vector<2x4x256xi1>, vector<2x4x256xf32>
    %91 = arith.maximumf %81, %90 : vector<2x4x256xf32>
    %cst_24 = arith.constant 0.000000e+00 : f32
    %92 = vector.shape_cast %10 : vector<1x256xi1> to vector<1x1x256xi1>
    %93 = vector.broadcast %92 : vector<1x1x256xi1> to vector<2x4x256xi1>
    %94 = vector.broadcast %cst_24 : f32 to vector<2x4x256xf32>
    %95 = arith.select %93, %75, %94 : vector<2x4x256xi1>, vector<2x4x256xf32>
    %96 = arith.addf %41, %95 : vector<2x4x256xf32>
    %c255_i32_25 = arith.constant 255 : i32
    %97 = tpu.dynamic_rotate %75 by %c255_i32_25 dim 2 : vector<2x4x256xf32>, i32 -> vector<2x4x256xf32>
    %cst_26 = arith.constant 0xFF800000 : f32
    %98 = vector.shape_cast %18 : vector<1x256xi1> to vector<1x1x256xi1>
    %99 = vector.broadcast %98 : vector<1x1x256xi1> to vector<2x4x256xi1>
    %100 = vector.broadcast %cst_26 : f32 to vector<2x4x256xf32>
    %101 = arith.select %99, %97, %100 : vector<2x4x256xi1>, vector<2x4x256xf32>
    %102 = arith.maximumf %91, %101 : vector<2x4x256xf32>
    %cst_27 = arith.constant 0.000000e+00 : f32
    %103 = vector.shape_cast %18 : vector<1x256xi1> to vector<1x1x256xi1>
    %104 = vector.broadcast %103 : vector<1x1x256xi1> to vector<2x4x256xi1>
    %105 = vector.broadcast %cst_27 : f32 to vector<2x4x256xf32>
    %106 = arith.select %104, %97, %105 : vector<2x4x256xi1>, vector<2x4x256xf32>
    %107 = arith.addf %86, %106 : vector<2x4x256xf32>
    %108 = arith.cmpf oeq, %0, %102 : vector<2x4x256xf32>
    %cst_28 = arith.constant 2.500000e-01 : f32
    %109 = vector.broadcast %cst_28 : f32 to vector<2x4x256xf32>
    %110 = arith.mulf %109, %107 : vector<2x4x256xf32>
    %111 = arith.mulf %96, %74 : vector<2x4x256xf32>
    %112 = arith.mulf %110, %110 : vector<2x4x256xf32>
    %113 = arith.subf %111, %112 : vector<2x4x256xf32>
    %114 = arith.addf %96, %74 : vector<2x4x256xf32>
    %115 = arith.mulf %114, %114 : vector<2x4x256xf32>
    %cst_29 = arith.constant 7.1999998 : f32
    %116 = vector.broadcast %cst_29 : f32 to vector<2x4x256xf32>
    %117 = arith.mulf %116, %113 : vector<2x4x256xf32>
    %118 = arith.cmpf ole, %115, %117 : vector<2x4x256xf32>
    %cst_30 = arith.constant 0.000000e+00 : f32
    %119 = vector.broadcast %cst_30 : f32 to vector<2x4x256xf32>
    %120 = arith.cmpf ogt, %113, %119 : vector<2x4x256xf32>
    %121 = arith.andi %118, %120 : vector<2x4x256xi1>
    %122 = arith.andi %5, %108 : vector<2x4x256xi1>
    %123 = arith.andi %122, %121 : vector<2x4x256xi1>
    %c0_31 = arith.constant 0 : index
    %c0_32 = arith.constant 0 : index
    %c0_33 = arith.constant 0 : index
    %124 = vector.load %arg3[%c0_31, %c0_32, %c0_33] : memref<2x4x256xi32, #tpu.memory_space<vmem>>, vector<2x4x256xi32>
    %125 = arith.extui %123 : vector<2x4x256xi1> to vector<2x4x256xi32>
    %cst_34 = arith.constant dense<0> : vector<2x4x256xi32>
    %126 = arith.cmpi ne, %124, %cst_34 : vector<2x4x256xi32>
    tpu.vector_store %arg3[%c0_31, %c0_32, %c0_33], %125 {strides = array<i32>} : memref<2x4x256xi32, #tpu.memory_space<vmem>>, vector<2x4x256xi32>,
    return
  }
  func.func @transform_0(%arg0: i32) -> (i32, i32, i32) {
    %c0_i32 = arith.constant 0 : i32
    %c0_i32_0 = arith.constant 0 : i32
    %c0_i32_1 = arith.constant 0 : i32
    return %arg0, %c0_i32, %c0_i32_0 : i32, i32, i32
  }
  func.func @transform_1(%arg0: i32) -> (i32, i32) {
    %c0_i32 = arith.constant 0 : i32
    %c0_i32_0 = arith.constant 0 : i32
    %c0_i32_1 = arith.constant 0 : i32
    return %c0_i32, %c0_i32_0 : i32, i32
  }
  func.func @transform_2(%arg0: i32) -> (i32, i32, i32) {
    %c0_i32 = arith.constant 0 : i32
    %c0_i32_0 = arith.constant 0 : i32
    %c0_i32_1 = arith.constant 0 : i32
    return %arg0, %c0_i32, %c0_i32_0 : i32, i32, i32
  }
}

module attributes {stable_mosaic.version = 11 : i64} {
  func.func @fused_detection_kernel(%arg0: i32, %arg1: memref<2x4x256xf32, #tpu.memory_space<vmem>>, %arg2: memref<1x256xi32, #tpu.memory_space<vmem>>, %arg3: memref<2x4x256xi8, #tpu.memory_space<vmem>>) attributes {dimension_semantics = [#tpu.dimension_semantics<parallel>], iteration_bounds = array<i64: 1>, scalar_prefetch = 0 : i64, scratch_operands = 0 : i64, tpu.core_type = #tpu.core_type<tc>, window_params = [{transform_indices = @transform_0, window_bounds = array<i64: 2, 4, 256>}, {pipeline_mode = #tpu.pipeline_mode<synchronous>, transform_indices = @transform_1, window_bounds = array<i64: 1, 256>}, {transform_indices = @transform_2, window_bounds = array<i64: 2, 4, 256>}]} {
    %c0 = arith.constant 0 : index
    %c0_0 = arith.constant 0 : index
    %c0_1 = arith.constant 0 : index
    %0 = vector.load %arg1[%c0, %c0_0, %c0_1] : memref<2x4x256xf32, #tpu.memory_space<vmem>>, vector<2x4x256xf32>
    %cst = arith.constant dense<0xFF800000> : vector<2x256xf32>
    %1 = vector.multi_reduction <maximumf>, %0, %cst [1] : vector<2x4x256xf32> to vector<2x256xf32>
    %2 = vector.shape_cast %1 : vector<2x256xf32> to vector<2x1x256xf32>
    %c0_2 = arith.constant 0 : index
    %c0_3 = arith.constant 0 : index
    %3 = vector.load %arg2[%c0_2, %c0_3] : memref<1x256xi32, #tpu.memory_space<vmem>>, vector<1x256xi32>
    %4 = vector.broadcast %2 : vector<2x1x256xf32> to vector<2x4x256xf32>
    %5 = arith.cmpf oeq, %0, %4 : vector<2x4x256xf32>
    %6 = tpu.iota {dimensions = array<i32: 1>} : vector<1x256xi32>
    %c16_i32 = arith.constant 16 : i32
    %7 = vector.broadcast %c16_i32 : i32 to vector<1x256xi32>
    %8 = arith.cmpi sge, %6, %7 : vector<1x256xi32>
    %c240_i32 = arith.constant 240 : i32
    %9 = vector.broadcast %c240_i32 : i32 to vector<1x256xi32>
    %10 = arith.cmpi slt, %6, %9 : vector<1x256xi32>
    %c1_i32 = arith.constant 1 : i32
    %11 = vector.broadcast %c1_i32 : i32 to vector<1x256xi32>
    %12 = arith.cmpi sge, %3, %11 : vector<1x256xi32>
    %c15_i32 = arith.constant 15 : i32
    %13 = vector.broadcast %c15_i32 : i32 to vector<1x256xi32>
    %14 = arith.cmpi slt, %3, %13 : vector<1x256xi32>
    %15 = arith.andi %8, %12 : vector<1x256xi1>
    %16 = arith.andi %8, %14 : vector<1x256xi1>
    %17 = arith.andi %10, %12 : vector<1x256xi1>
    %18 = arith.andi %10, %14 : vector<1x256xi1>
    %cst_4 = arith.constant -2.000000e+00 : f32
    %19 = vector.broadcast %cst_4 : f32 to vector<2x4x256xf32>
    %20 = arith.mulf %19, %0 : vector<2x4x256xf32>
    %c16_i32_5 = arith.constant 16 : i32
    %21 = tpu.dynamic_rotate %0 by %c16_i32_5 dim 2 : vector<2x4x256xf32>, i32 -> vector<2x4x256xf32>
    %c1_i32_6 = arith.constant 1 : i32
    %22 = tpu.dynamic_rotate %21 by %c1_i32_6 dim 2 : vector<2x4x256xf32>, i32 -> vector<2x4x256xf32>
    %cst_7 = arith.constant 0xFF800000 : f32
    %23 = vector.shape_cast %15 : vector<1x256xi1> to vector<1x1x256xi1>
    %24 = vector.broadcast %23 : vector<1x1x256xi1> to vector<2x4x256xi1>
    %25 = vector.broadcast %cst_7 : f32 to vector<2x4x256xf32>
    %26 = arith.select %24, %22, %25 : vector<2x4x256xi1>, vector<2x4x256xf32>
    %27 = arith.maximumf %0, %26 : vector<2x4x256xf32>
    %cst_8 = arith.constant 0.000000e+00 : f32
    %28 = vector.shape_cast %15 : vector<1x256xi1> to vector<1x1x256xi1>
    %29 = vector.broadcast %28 : vector<1x1x256xi1> to vector<2x4x256xi1>
    %30 = vector.broadcast %cst_8 : f32 to vector<2x4x256xf32>
    %31 = arith.select %29, %22, %30 : vector<2x4x256xi1>, vector<2x4x256xf32>
    %cst_9 = arith.constant 0xFF800000 : f32
    %32 = vector.shape_cast %8 : vector<1x256xi1> to vector<1x1x256xi1>
    %33 = vector.broadcast %32 : vector<1x1x256xi1> to vector<2x4x256xi1>
    %34 = vector.broadcast %cst_9 : f32 to vector<2x4x256xf32>
    %35 = arith.select %33, %21, %34 : vector<2x4x256xi1>, vector<2x4x256xf32>
    %36 = arith.maximumf %27, %35 : vector<2x4x256xf32>
    %cst_10 = arith.constant 0.000000e+00 : f32
    %37 = vector.shape_cast %8 : vector<1x256xi1> to vector<1x1x256xi1>
    %38 = vector.broadcast %37 : vector<1x1x256xi1> to vector<2x4x256xi1>
    %39 = vector.broadcast %cst_10 : f32 to vector<2x4x256xf32>
    %40 = arith.select %38, %21, %39 : vector<2x4x256xi1>, vector<2x4x256xf32>
    %41 = arith.addf %20, %40 : vector<2x4x256xf32>
    %c255_i32 = arith.constant 255 : i32
    %42 = tpu.dynamic_rotate %21 by %c255_i32 dim 2 : vector<2x4x256xf32>, i32 -> vector<2x4x256xf32>
    %cst_11 = arith.constant 0xFF800000 : f32
    %43 = vector.shape_cast %16 : vector<1x256xi1> to vector<1x1x256xi1>
    %44 = vector.broadcast %43 : vector<1x1x256xi1> to vector<2x4x256xi1>
    %45 = vector.broadcast %cst_11 : f32 to vector<2x4x256xf32>
    %46 = arith.select %44, %42, %45 : vector<2x4x256xi1>, vector<2x4x256xf32>
    %47 = arith.maximumf %36, %46 : vector<2x4x256xf32>
    %cst_12 = arith.constant 0.000000e+00 : f32
    %48 = vector.shape_cast %16 : vector<1x256xi1> to vector<1x1x256xi1>
    %49 = vector.broadcast %48 : vector<1x1x256xi1> to vector<2x4x256xi1>
    %50 = vector.broadcast %cst_12 : f32 to vector<2x4x256xf32>
    %51 = arith.select %49, %42, %50 : vector<2x4x256xi1>, vector<2x4x256xf32>
    %52 = arith.subf %31, %51 : vector<2x4x256xf32>
    %c1_i32_13 = arith.constant 1 : i32
    %53 = tpu.dynamic_rotate %0 by %c1_i32_13 dim 2 : vector<2x4x256xf32>, i32 -> vector<2x4x256xf32>
    %cst_14 = arith.constant 0xFF800000 : f32
    %54 = vector.shape_cast %12 : vector<1x256xi1> to vector<1x1x256xi1>
    %55 = vector.broadcast %54 : vector<1x1x256xi1> to vector<2x4x256xi1>
    %56 = vector.broadcast %cst_14 : f32 to vector<2x4x256xf32>
    %57 = arith.select %55, %53, %56 : vector<2x4x256xi1>, vector<2x4x256xf32>
    %58 = arith.maximumf %47, %57 : vector<2x4x256xf32>
    %cst_15 = arith.constant 0.000000e+00 : f32
    %59 = vector.shape_cast %12 : vector<1x256xi1> to vector<1x1x256xi1>
    %60 = vector.broadcast %59 : vector<1x1x256xi1> to vector<2x4x256xi1>
    %61 = vector.broadcast %cst_15 : f32 to vector<2x4x256xf32>
    %62 = arith.select %60, %53, %61 : vector<2x4x256xi1>, vector<2x4x256xf32>
    %63 = arith.addf %20, %62 : vector<2x4x256xf32>
    %c255_i32_16 = arith.constant 255 : i32
    %64 = tpu.dynamic_rotate %0 by %c255_i32_16 dim 2 : vector<2x4x256xf32>, i32 -> vector<2x4x256xf32>
    %cst_17 = arith.constant 0xFF800000 : f32
    %65 = vector.shape_cast %14 : vector<1x256xi1> to vector<1x1x256xi1>
    %66 = vector.broadcast %65 : vector<1x1x256xi1> to vector<2x4x256xi1>
    %67 = vector.broadcast %cst_17 : f32 to vector<2x4x256xf32>
    %68 = arith.select %66, %64, %67 : vector<2x4x256xi1>, vector<2x4x256xf32>
    %69 = arith.maximumf %58, %68 : vector<2x4x256xf32>
    %cst_18 = arith.constant 0.000000e+00 : f32
    %70 = vector.shape_cast %14 : vector<1x256xi1> to vector<1x1x256xi1>
    %71 = vector.broadcast %70 : vector<1x1x256xi1> to vector<2x4x256xi1>
    %72 = vector.broadcast %cst_18 : f32 to vector<2x4x256xf32>
    %73 = arith.select %71, %64, %72 : vector<2x4x256xi1>, vector<2x4x256xf32>
    %74 = arith.addf %63, %73 : vector<2x4x256xf32>
    %c240_i32_19 = arith.constant 240 : i32
    %75 = tpu.dynamic_rotate %0 by %c240_i32_19 dim 2 : vector<2x4x256xf32>, i32 -> vector<2x4x256xf32>
    %c1_i32_20 = arith.constant 1 : i32
    %76 = tpu.dynamic_rotate %75 by %c1_i32_20 dim 2 : vector<2x4x256xf32>, i32 -> vector<2x4x256xf32>
    %cst_21 = arith.constant 0xFF800000 : f32
    %77 = vector.shape_cast %17 : vector<1x256xi1> to vector<1x1x256xi1>
    %78 = vector.broadcast %77 : vector<1x1x256xi1> to vector<2x4x256xi1>
    %79 = vector.broadcast %cst_21 : f32 to vector<2x4x256xf32>
    %80 = arith.select %78, %76, %79 : vector<2x4x256xi1>, vector<2x4x256xf32>
    %81 = arith.maximumf %69, %80 : vector<2x4x256xf32>
    %cst_22 = arith.constant 0.000000e+00 : f32
    %82 = vector.shape_cast %17 : vector<1x256xi1> to vector<1x1x256xi1>
    %83 = vector.broadcast %82 : vector<1x1x256xi1> to vector<2x4x256xi1>
    %84 = vector.broadcast %cst_22 : f32 to vector<2x4x256xf32>
    %85 = arith.select %83, %76, %84 : vector<2x4x256xi1>, vector<2x4x256xf32>
    %86 = arith.subf %52, %85 : vector<2x4x256xf32>
    %cst_23 = arith.constant 0xFF800000 : f32
    %87 = vector.shape_cast %10 : vector<1x256xi1> to vector<1x1x256xi1>
    %88 = vector.broadcast %87 : vector<1x1x256xi1> to vector<2x4x256xi1>
    %89 = vector.broadcast %cst_23 : f32 to vector<2x4x256xf32>
    %90 = arith.select %88, %75, %89 : vector<2x4x256xi1>, vector<2x4x256xf32>
    %91 = arith.maximumf %81, %90 : vector<2x4x256xf32>
    %cst_24 = arith.constant 0.000000e+00 : f32
    %92 = vector.shape_cast %10 : vector<1x256xi1> to vector<1x1x256xi1>
    %93 = vector.broadcast %92 : vector<1x1x256xi1> to vector<2x4x256xi1>
    %94 = vector.broadcast %cst_24 : f32 to vector<2x4x256xf32>
    %95 = arith.select %93, %75, %94 : vector<2x4x256xi1>, vector<2x4x256xf32>
    %96 = arith.addf %41, %95 : vector<2x4x256xf32>
    %c255_i32_25 = arith.constant 255 : i32
    %97 = tpu.dynamic_rotate %75 by %c255_i32_25 dim 2 : vector<2x4x256xf32>, i32 -> vector<2x4x256xf32>
    %cst_26 = arith.constant 0xFF800000 : f32
    %98 = vector.shape_cast %18 : vector<1x256xi1> to vector<1x1x256xi1>
    %99 = vector.broadcast %98 : vector<1x1x256xi1> to vector<2x4x256xi1>
    %100 = vector.broadcast %cst_26 : f32 to vector<2x4x256xf32>
    %101 = arith.select %99, %97, %100 : vector<2x4x256xi1>, vector<2x4x256xf32>
    %102 = arith.maximumf %91, %101 : vector<2x4x256xf32>
    %cst_27 = arith.constant 0.000000e+00 : f32
    %103 = vector.shape_cast %18 : vector<1x256xi1> to vector<1x1x256xi1>
    %104 = vector.broadcast %103 : vector<1x1x256xi1> to vector<2x4x256xi1>
    %105 = vector.broadcast %cst_27 : f32 to vector<2x4x256xf32>
    %106 = arith.select %104, %97, %105 : vector<2x4x256xi1>, vector<2x4x256xf32>
    %107 = arith.addf %86, %106 : vector<2x4x256xf32>
    %108 = arith.cmpf oeq, %0, %102 : vector<2x4x256xf32>
    %cst_28 = arith.constant 2.500000e-01 : f32
    %109 = vector.broadcast %cst_28 : f32 to vector<2x4x256xf32>
    %110 = arith.mulf %109, %107 : vector<2x4x256xf32>
    %111 = arith.mulf %96, %74 : vector<2x4x256xf32>
    %112 = arith.mulf %110, %110 : vector<2x4x256xf32>
    %113 = arith.subf %111, %112 : vector<2x4x256xf32>
    %114 = arith.addf %96, %74 : vector<2x4x256xf32>
    %115 = arith.mulf %114, %114 : vector<2x4x256xf32>
    %cst_29 = arith.constant 7.1999998 : f32
    %116 = vector.broadcast %cst_29 : f32 to vector<2x4x256xf32>
    %117 = arith.mulf %116, %113 : vector<2x4x256xf32>
    %118 = arith.cmpf ole, %115, %117 : vector<2x4x256xf32>
    %cst_30 = arith.constant 0.000000e+00 : f32
    %119 = vector.broadcast %cst_30 : f32 to vector<2x4x256xf32>
    %120 = arith.cmpf ogt, %113, %119 : vector<2x4x256xf32>
    %121 = arith.andi %118, %120 : vector<2x4x256xi1>
    %122 = arith.andi %5, %108 : vector<2x4x256xi1>
    %123 = arith.andi %122, %121 : vector<2x4x256xi1>
    %124 = arith.extui %123 : vector<2x4x256xi1> to vector<2x4x256xi8>
    %c0_31 = arith.constant 0 : index
    %c0_32 = arith.constant 0 : index
    %c0_33 = arith.constant 0 : index
    %125 = vector.load %arg3[%c0_31, %c0_32, %c0_33] : memref<2x4x256xi8, #tpu.memory_space<vmem>>, vector<2x4x256xi8>
    tpu.vector_store %arg3[%c0_31, %c0_32, %c0_33], %124 {strides = array<i32>} : memref<2x4x256xi8, #tpu.memory_space<vmem>>, vector<2x4x256xi8>,
    return
  }
  func.func @transform_0(%arg0: i32) -> (i32, i32, i32) {
    %c0_i32 = arith.constant 0 : i32
    %c0_i32_0 = arith.constant 0 : i32
    %c0_i32_1 = arith.constant 0 : i32
    return %arg0, %c0_i32, %c0_i32_0 : i32, i32, i32
  }
  func.func @transform_1(%arg0: i32) -> (i32, i32) {
    %c0_i32 = arith.constant 0 : i32
    %c0_i32_0 = arith.constant 0 : i32
    %c0_i32_1 = arith.constant 0 : i32
    return %c0_i32, %c0_i32_0 : i32, i32
  }
  func.func @transform_2(%arg0: i32) -> (i32, i32, i32) {
    %c0_i32 = arith.constant 0 : i32
    %c0_i32_0 = arith.constant 0 : i32
    %c0_i32_1 = arith.constant 0 : i32
    return %arg0, %c0_i32, %c0_i32_0 : i32, i32, i32
  }
}

</mosaic_0001>

<llo_original>
// kernel: tpu_custom_call.1
$region0: #{tpu_custom_call.1}
  #allocation0 [shape = 'u32[]', space=smem, size = 0x4, offset = 0x4, fixed_abs, tag = 'smem constant byte address 0x4 - core index']
  #allocation1 [shape = 'u32[144,128]{1,0:T(1,128)}', space=vmem, size = 0x12000, scoped, tag = 'internal scratch']
  %s0 = inlined_call_operand.hbm [shape: f32[2,4,256], index: 0, kind: input, shape index: {}]
  %s1 = inlined_call_operand.vmem [shape: s32[1,256], index: 1, kind: input, shape index: {}]
  %s2 = inlined_call_operand.vmem [shape: s32[2,4,256], index: 2, kind: output, shape index: {}]
  %s3 = sld [smem:[#allocation0]]
  $region22: #{tpu_custom_call.1} parent=0
    _
  %s5 = ssub.s32 1, %s3
  %s6 = scalar_select 0, %s5, %s3
  $region1: #{tpu_custom_call.1} parent=0
    #allocation2 [shape = 'u8[8192]{0}', space=vmem, size = 0x2000, scoped, tag = 'input window, operand 0, single buffered']
    #allocation3 [shape = 's32[1]{0}', space=sflag, size = 0x4, scoped, tag = 'scoped memory for tpu_custom_call.1']
    %7 = vsyncpa [#allocation3], 0
    // Predicated region
    $region2: #{tpu_custom_call.1} parent=1 // pred_check
      _
    $region3: #{tpu_custom_call.1} parent=1 // pred_check_branch
      %9 = sbr.rel (0) target = $region5
    $region4: #{tpu_custom_call.1} parent=1 // pred_region
      %s11 = ssub.s32 256, 256
      %12 = vsyncadd [#allocation3], %s11
      %s13 = sshll.u32 [#allocation2], 4
      %s14 = int_to_ptr.vmem [resolvable:$true] %s13
      %19 = dma.hbm_to_vmem [thread:$0]  %s0, 256, %s14, [#allocation3], 128, 128, 8
    $region5: #{tpu_custom_call.1} parent=1 // pred_fallthru
      _
    // Predicated region
    $region6: #{tpu_custom_call.1} parent=1 // pred_check
      _
    $region7: #{tpu_custom_call.1} parent=1 // pred_check_branch
      %21 = sbr.rel (0) target = $region9
    $region8: #{tpu_custom_call.1} parent=1 // pred_region
      _
    $region9: #{tpu_custom_call.1} parent=1 // pred_fallthru
      _
    // Predicated region
    $region10: #{tpu_custom_call.1} parent=1 // pred_check
      _
    $region11: #{tpu_custom_call.1} parent=1 // pred_check_branch
      %23 = sbr.rel (0) target = $region13
    $region12: #{tpu_custom_call.1} parent=1 // pred_region
      %24 = dma.done [#allocation3], 256
    $region13: #{tpu_custom_call.1} parent=1 // pred_fallthru
      _
    %v25 = vld [vmem:[#allocation2] sm:$0xff]
    %v26 = vld [vmem:[#allocation2 + $0x8] sm:$0xff]
    %v29 = vcombine.high %v25, %v25
    %v30 = vcombine.high %v26, %v26
    %vm33 = vcmask 1043456
    %v34 = vsel %vm33, %v25, -inf
    %v35 = vrot.slane %v34, 4
    %v36 = vmax.f32 %v34, %v35
    %v37 = vrot.slane %v36, 2
    %v38 = vmax.f32 %v36, %v37
    %v39 = vrot.slane %v38, 1
    %v40 = vmax.f32 %v38, %v39
    %v41 = vsel %vm33, %v29, -inf
    %v42 = vrot.slane %v41, 4
    %v43 = vmax.f32 %v41, %v42
    %v44 = vrot.slane %v43, 2
    %v45 = vmax.f32 %v43, %v44
    %v46 = vrot.slane %v45, 1
    %v47 = vmax.f32 %v45, %v46
    %v48 = vsel %vm33, %v26, -inf
    %v49 = vrot.slane %v48, 4
    %v50 = vmax.f32 %v48, %v49
    %v51 = vrot.slane %v50, 2
    %v52 = vmax.f32 %v50, %v51
    %v53 = vrot.slane %v52, 1
    %v54 = vmax.f32 %v52, %v53
    %v55 = vsel %vm33, %v30, -inf
    %v56 = vrot.slane %v55, 4
    %v57 = vmax.f32 %v55, %v56
    %v58 = vrot.slane %v57, 2
    %v59 = vmax.f32 %v57, %v58
    %v60 = vrot.slane %v59, 1
    %v61 = vmax.f32 %v59, %v60
    %v62 = vld [vmem:[%s1] sm:$0x3]
    %v67 = vcombine.low %v40, %v47
    %v68 = vcombine.low %v54, %v61
    %vm71 = vcmp.eq.f32.partialorder %v25, %v67
    %vm72 = vcmp.eq.f32.partialorder %v26, %v68
    %v73 = vlaneseq
    %v74 = vand.u32 %v73, 127
    %v75 = vadd.s32 %v74, 128
    %vm76 = vcmp.ge.s32.totalorder %v74, 16
    %vm77 = vcmp.ge.s32.totalorder %v75, 16
    %vm78 = vcmp.lt.s32.totalorder %v74, 240
    %vm79 = vcmp.lt.s32.totalorder %v75, 240
    %vm80 = vcmp.ge.s32.totalorder %v62, 1
    %vm81 = vcmp.lt.s32.totalorder %v62, 15
    %v82 = vsel %vm80, 1, 0
    %v83 = vlaneseq
    %v84 = vshrl.u32 %v83, 7
    %v85 = vsub.s32 0, %v84
    %v86 = vrot.slane %v82, %v85
    %v87 = vlaneseq
    %v88 = vshrl.u32 %v87, 7
    %v89 = vsub.s32 1, %v88
    %v90 = vrot.slane %v82, %v89
    %vm91 = vcmp.ne.s32.totalorder %v86, 0
    %vm92 = vcmp.ne.s32.totalorder %v90, 0
    %vm93 = vmand %vm76, %vm91
    %vm94 = vmand %vm77, %vm92
    %v95 = vsel %vm81, 1, 0
    %v96 = vlaneseq
    %v97 = vshrl.u32 %v96, 7
    %v98 = vsub.s32 0, %v97
    %v99 = vrot.slane %v95, %v98
    %v100 = vlaneseq
    %v101 = vshrl.u32 %v100, 7
    %v102 = vsub.s32 1, %v101
    %v103 = vrot.slane %v95, %v102
    %vm104 = vcmp.ne.s32.totalorder %v99, 0
    %vm105 = vcmp.ne.s32.totalorder %v103, 0
    %vm106 = vmand %vm76, %vm104
    %vm107 = vmand %vm77, %vm105
    %vm108 = vmand %vm78, %vm91
    %vm109 = vmand %vm79, %vm92
    %vm110 = vmand %vm78, %vm104
    %vm111 = vmand %vm79, %vm105
    %v112 = vmul.f32 %v25, -2.0
    %v113 = vmul.f32 %v26, -2.0
    %114 = vrot.lane.b32.xlu0 %v25, 16
    %v115 = vpop.permute.xlu0 %114
    %116 = vrot.lane.b32.xlu0 %v26, 16
    %v117 = vpop.permute.xlu0 %116
    %118 = vrot.lane.b32.xlu0 %v29, 16
    %v119 = vpop.permute.xlu0 %118
    %120 = vrot.lane.b32.xlu0 %v30, 16
    %v121 = vpop.permute.xlu0 %120
    %vm122 = vcmp.lt.s32.totalorder %v74, 16
    %v123 = vsel %vm122, %v115, %v119
    %v124 = vsel %vm122, %v117, %v121
    %v125 = vsel %vm122, %v119, %v115
    %v126 = vsel %vm122, %v121, %v117
    %127 = vrot.lane.b32.xlu0 %v125, 1
    %v128 = vpop.permute.xlu0 %127
    %129 = vrot.lane.b32.xlu0 %v126, 1
    %v130 = vpop.permute.xlu0 %129
    %131 = vrot.lane.b32.xlu0 %v123, 1
    %v132 = vpop.permute.xlu0 %131
    %133 = vrot.lane.b32.xlu0 %v124, 1
    %v134 = vpop.permute.xlu0 %133
    %vm135 = vcmp.lt.s32.totalorder %v74, 1
    %v136 = vsel %vm135, %v128, %v132
    %v137 = vsel %vm135, %v130, %v134
    %v138 = vsel %vm135, %v132, %v128
    %v139 = vsel %vm135, %v134, %v130
    %v140 = vsel %vm93, 1, 0
    %v141 = vsel %vm94, 1, 0
    %v142 = vlaneseq
    %v143 = vshrl.u32 %v142, 7
    %v144 = vsub.s32 0, %v143
    %v145 = vrot.slane %v140, %v144
    %v146 = vlaneseq
    %v147 = vshrl.u32 %v146, 7
    %v148 = vsub.s32 0, %v147
    %v149 = vrot.slane %v141, %v148
    %vm150 = vcmp.eq.s32.totalorder %v145, 1
    %vm151 = vcmp.eq.s32.totalorder %v149, 1
    %v152 = vsel %vm150, %v138, -inf
    %v153 = vsel %vm151, %v136, -inf
    %v154 = vsel %vm150, %v139, -inf
    %v155 = vsel %vm151, %v137, -inf
    %v160 = vcombine.low %v152, %v153
    %v161 = vcombine.low %v154, %v155
    %v164 = vmax.f32 %v25, %v160
    %v165 = vmax.f32 %v26, %v161
    %v166 = vsel %vm150, %v138, 0.0
    %v167 = vsel %vm151, %v136, 0.0
    %v168 = vsel %vm150, %v139, 0.0
    %v169 = vsel %vm151, %v137, 0.0
    %v170 = vsel %vm76, 1, 0
    %v171 = vsel %vm77, 1, 0
    %vm172 = vcmp.eq.s32.totalorder %v170, 1
    %vm173 = vcmp.eq.s32.totalorder %v171, 1
    %v174 = vsel %vm172, %v125, -inf
    %v175 = vsel %vm173, %v123, -inf
    %v176 = vsel %vm172, %v126, -inf
    %v177 = vsel %vm173, %v124, -inf
    %v182 = vcombine.low %v174, %v175
    %v183 = vcombine.low %v176, %v177
    %v186 = vmax.f32 %v164, %v182
    %v187 = vmax.f32 %v165, %v183
    %v188 = vsel %vm172, %v125, 0.0
    %v189 = vsel %vm173, %v123, 0.0
    %v190 = vsel %vm172, %v126, 0.0
    %v191 = vsel %vm173, %v124, 0.0
    %v196 = vcombine.low %v188, %v189
    %v197 = vcombine.low %v190, %v191
    %v200 = vadd.f32 %v112, %v196
    %v201 = vadd.f32 %v113, %v197
    %202 = vrot.lane.b32.xlu0 %v125, 127
    %v203 = vpop.permute.xlu0 %202
    %204 = vrot.lane.b32.xlu0 %v126, 127
    %v205 = vpop.permute.xlu0 %204
    %206 = vrot.lane.b32.xlu0 %v123, 127
    %v207 = vpop.permute.xlu0 %206
    %208 = vrot.lane.b32.xlu0 %v124, 127
    %v209 = vpop.permute.xlu0 %208
    %vm210 = vcmp.lt.s32.totalorder %v74, 127
    %v211 = vsel %vm210, %v203, %v207
    %v212 = vsel %vm210, %v205, %v209
    %v213 = vsel %vm210, %v207, %v203
    %v214 = vsel %vm210, %v209, %v205
    %v215 = vsel %vm106, 1, 0
    %v216 = vsel %vm107, 1, 0
    %v217 = vlaneseq
    %v218 = vshrl.u32 %v217, 7
    %v219 = vsub.s32 0, %v218
    %v220 = vrot.slane %v215, %v219
    %v221 = vlaneseq
    %v222 = vshrl.u32 %v221, 7
    %v223 = vsub.s32 0, %v222
    %v224 = vrot.slane %v216, %v223
    %vm225 = vcmp.eq.s32.totalorder %v220, 1
    %vm226 = vcmp.eq.s32.totalorder %v224, 1
    %v227 = vsel %vm225, %v211, -inf
    %v228 = vsel %vm226, %v213, -inf
    %v229 = vsel %vm225, %v212, -inf
    %v230 = vsel %vm226, %v214, -inf
    %v235 = vcombine.low %v227, %v228
    %v236 = vcombine.low %v229, %v230
    %v239 = vmax.f32 %v186, %v235
    %v240 = vmax.f32 %v187, %v236
    %v241 = vsel %vm225, %v211, 0.0
    %v242 = vsel %vm226, %v213, 0.0
    %v243 = vsel %vm225, %v212, 0.0
    %v244 = vsel %vm226, %v214, 0.0
    %v245 = vsub.f32 %v166, %v241
    %v246 = vsub.f32 %v167, %v242
    %v247 = vsub.f32 %v168, %v243
    %v248 = vsub.f32 %v169, %v244
    %249 = vrot.lane.b32.xlu0 %v25, 1
    %v250 = vpop.permute.xlu0 %249
    %251 = vrot.lane.b32.xlu0 %v26, 1
    %v252 = vpop.permute.xlu0 %251
    %253 = vrot.lane.b32.xlu0 %v29, 1
    %v254 = vpop.permute.xlu0 %253
    %255 = vrot.lane.b32.xlu0 %v30, 1
    %v256 = vpop.permute.xlu0 %255
    %v257 = vsel %vm135, %v250, %v254
    %v258 = vsel %vm135, %v252, %v256
    %v259 = vsel %vm135, %v254, %v250
    %v260 = vsel %vm135, %v256, %v252
    %vm261 = vcmp.eq.s32.totalorder %v86, 1
    %vm262 = vcmp.eq.s32.totalorder %v90, 1
    %v263 = vsel %vm261, %v259, -inf
    %v264 = vsel %vm262, %v257, -inf
    %v265 = vsel %vm261, %v260, -inf
    %v266 = vsel %vm262, %v258, -inf
    %v271 = vcombine.low %v263, %v264
    %v272 = vcombine.low %v265, %v266
    %v275 = vmax.f32 %v239, %v271
    %v276 = vmax.f32 %v240, %v272
    %v277 = vsel %vm261, %v259, 0.0
    %v278 = vsel %vm262, %v257, 0.0
    %v279 = vsel %vm261, %v260, 0.0
    %v280 = vsel %vm262, %v258, 0.0
    %v285 = vcombine.low %v277, %v278
    %v286 = vcombine.low %v279, %v280
    %v289 = vadd.f32 %v112, %v285
    %v290 = vadd.f32 %v113, %v286
    %291 = vrot.lane.b32.xlu0 %v25, 127
    %v292 = vpop.permute.xlu0 %291
    %293 = vrot.lane.b32.xlu0 %v26, 127
    %v294 = vpop.permute.xlu0 %293
    %295 = vrot.lane.b32.xlu0 %v29, 127
    %v296 = vpop.permute.xlu0 %295
    %297 = vrot.lane.b32.xlu0 %v30, 127
    %v298 = vpop.permute.xlu0 %297
    %v299 = vsel %vm210, %v292, %v296
    %v300 = vsel %vm210, %v294, %v298
    %v301 = vsel %vm210, %v296, %v292
    %v302 = vsel %vm210, %v298, %v294
    %vm303 = vcmp.eq.s32.totalorder %v99, 1
    %vm304 = vcmp.eq.s32.totalorder %v103, 1
    %v305 = vsel %vm303, %v299, -inf
    %v306 = vsel %vm304, %v301, -inf
    %v307 = vsel %vm303, %v300, -inf
    %v308 = vsel %vm304, %v302, -inf
    %v313 = vcombine.low %v305, %v306
    %v314 = vcombine.low %v307, %v308
    %v317 = vmax.f32 %v275, %v313
    %v318 = vmax.f32 %v276, %v314
    %v319 = vsel %vm303, %v299, 0.0
    %v320 = vsel %vm304, %v301, 0.0
    %v321 = vsel %vm303, %v300, 0.0
    %v322 = vsel %vm304, %v302, 0.0
    %v327 = vcombine.low %v319, %v320
    %v328 = vcombine.low %v321, %v322
    %v331 = vadd.f32 %v289, %v327
    %v332 = vadd.f32 %v290, %v328
    %333 = vrot.lane.b32.xlu0 %v25, 112
    %v334 = vpop.permute.xlu0 %333
    %335 = vrot.lane.b32.xlu0 %v26, 112
    %v336 = vpop.permute.xlu0 %335
    %337 = vrot.lane.b32.xlu0 %v29, 112
    %v338 = vpop.permute.xlu0 %337
    %339 = vrot.lane.b32.xlu0 %v30, 112
    %v340 = vpop.permute.xlu0 %339
    %vm341 = vcmp.lt.s32.totalorder %v74, 112
    %v342 = vsel %vm341, %v334, %v338
    %v343 = vsel %vm341, %v336, %v340
    %v344 = vsel %vm341, %v338, %v334
    %v345 = vsel %vm341, %v340, %v336
    %346 = vrot.lane.b32.xlu0 %v342, 1
    %v347 = vpop.permute.xlu0 %346
    %348 = vrot.lane.b32.xlu0 %v343, 1
    %v349 = vpop.permute.xlu0 %348
    %350 = vrot.lane.b32.xlu0 %v344, 1
    %v351 = vpop.permute.xlu0 %350
    %352 = vrot.lane.b32.xlu0 %v345, 1
    %v353 = vpop.permute.xlu0 %352
    %v354 = vsel %vm135, %v347, %v351
    %v355 = vsel %vm135, %v349, %v353
    %v356 = vsel %vm135, %v351, %v347
    %v357 = vsel %vm135, %v353, %v349
    %v358 = vsel %vm108, 1, 0
    %v359 = vsel %vm109, 1, 0
    %v360 = vlaneseq
    %v361 = vshrl.u32 %v360, 7
    %v362 = vsub.s32 0, %v361
    %v363 = vrot.slane %v358, %v362
    %v364 = vlaneseq
    %v365 = vshrl.u32 %v364, 7
    %v366 = vsub.s32 0, %v365
    %v367 = vrot.slane %v359, %v366
    %vm368 = vcmp.eq.s32.totalorder %v363, 1
    %vm369 = vcmp.eq.s32.totalorder %v367, 1
    %v370 = vsel %vm368, %v356, -inf
    %v371 = vsel %vm369, %v354, -inf
    %v372 = vsel %vm368, %v357, -inf
    %v373 = vsel %vm369, %v355, -inf
    %v378 = vcombine.low %v370, %v371
    %v379 = vcombine.low %v372, %v373
    %v382 = vmax.f32 %v317, %v378
    %v383 = vmax.f32 %v318, %v379
    %v384 = vsel %vm368, %v356, 0.0
    %v385 = vsel %vm369, %v354, 0.0
    %v386 = vsel %vm368, %v357, 0.0
    %v387 = vsel %vm369, %v355, 0.0
    %v388 = vsub.f32 %v245, %v384
    %v389 = vsub.f32 %v246, %v385
    %v390 = vsub.f32 %v247, %v386
    %v391 = vsub.f32 %v248, %v387
    %v392 = vsel %vm78, 1, 0
    %v393 = vsel %vm79, 1, 0
    %vm394 = vcmp.eq.s32.totalorder %v392, 1
    %vm395 = vcmp.eq.s32.totalorder %v393, 1
    %v396 = vsel %vm394, %v342, -inf
    %v397 = vsel %vm395, %v344, -inf
    %v398 = vsel %vm394, %v343, -inf
    %v399 = vsel %vm395, %v345, -inf
    %v404 = vcombine.low %v396, %v397
    %v405 = vcombine.low %v398, %v399
    %v408 = vmax.f32 %v382, %v404
    %v409 = vmax.f32 %v383, %v405
    %v410 = vsel %vm394, %v342, 0.0
    %v411 = vsel %vm395, %v344, 0.0
    %v412 = vsel %vm394, %v343, 0.0
    %v413 = vsel %vm395, %v345, 0.0
    %v418 = vcombine.low %v410, %v411
    %v419 = vcombine.low %v412, %v413
    %v422 = vadd.f32 %v200, %v418
    %v423 = vadd.f32 %v201, %v419
    %424 = vrot.lane.b32.xlu0 %v342, 127
    %v425 = vpop.permute.xlu0 %424
    %426 = vrot.lane.b32.xlu0 %v343, 127
    %v427 = vpop.permute.xlu0 %426
    %428 = vrot.lane.b32.xlu0 %v344, 127
    %v429 = vpop.permute.xlu0 %428
    %430 = vrot.lane.b32.xlu0 %v345, 127
    %v431 = vpop.permute.xlu0 %430
    %v432 = vsel %vm210, %v425, %v429
    %v433 = vsel %vm210, %v427, %v431
    %v434 = vsel %vm210, %v429, %v425
    %v435 = vsel %vm210, %v431, %v427
    %v436 = vsel %vm110, 1, 0
    %v437 = vsel %vm111, 1, 0
    %v438 = vlaneseq
    %v439 = vshrl.u32 %v438, 7
    %v440 = vsub.s32 0, %v439
    %v441 = vrot.slane %v436, %v440
    %v442 = vlaneseq
    %v443 = vshrl.u32 %v442, 7
    %v444 = vsub.s32 0, %v443
    %v445 = vrot.slane %v437, %v444
    %vm446 = vcmp.eq.s32.totalorder %v441, 1
    %vm447 = vcmp.eq.s32.totalorder %v445, 1
    %v448 = vsel %vm446, %v432, -inf
    %v449 = vsel %vm447, %v434, -inf
    %v450 = vsel %vm446, %v433, -inf
    %v451 = vsel %vm447, %v435, -inf
    %v456 = vcombine.low %v448, %v449
    %v457 = vcombine.low %v450, %v451
    %v460 = vmax.f32 %v408, %v456
    %v461 = vmax.f32 %v409, %v457
    %v462 = vsel %vm446, %v432, 0.0
    %v463 = vsel %vm447, %v434, 0.0
    %v464 = vsel %vm446, %v433, 0.0
    %v465 = vsel %vm447, %v435, 0.0
    %v466 = vadd.f32 %v388, %v462
    %v467 = vadd.f32 %v389, %v463
    %v468 = vadd.f32 %v390, %v464
    %v469 = vadd.f32 %v391, %v465
    %vm470 = vcmp.eq.f32.partialorder %v25, %v460
    %vm471 = vcmp.eq.f32.partialorder %v26, %v461
    %v472 = vmul.f32 %v466, 0.25
    %v473 = vmul.f32 %v467, 0.25
    %v474 = vmul.f32 %v468, 0.25
    %v475 = vmul.f32 %v469, 0.25
    %v476 = vmul.f32 %v422, %v331
    %v477 = vmul.f32 %v423, %v332
    %v478 = vmul.f32 %v472, %v472
    %v479 = vmul.f32 %v473, %v473
    %v480 = vmul.f32 %v474, %v474
    %v481 = vmul.f32 %v475, %v475
    %v486 = vcombine.low %v478, %v479
    %v487 = vcombine.low %v480, %v481
    %v490 = vsub.f32 %v476, %v486
    %v491 = vsub.f32 %v477, %v487
    %v492 = vadd.f32 %v422, %v331
    %v493 = vadd.f32 %v423, %v332
    %v494 = vmul.f32 %v492, %v492
    %v495 = vmul.f32 %v493, %v493
    %v496 = vmul.f32 %v490, 7.2
    %v497 = vmul.f32 %v491, 7.2
    %vm498 = vcmp.le.f32.partialorder %v494, %v496
    %vm499 = vcmp.le.f32.partialorder %v495, %v497
    %vm500 = vcmp.gt.f32.partialorder %v490, 0.0
    %vm501 = vcmp.gt.f32.partialorder %v491, 0.0
    %vm502 = vmand %vm498, %vm500
    %vm503 = vmand %vm499, %vm501
    %vm504 = vmand %vm71, %vm470
    %vm505 = vmand %vm72, %vm471
    %vm506 = vmand %vm504, %vm502
    %vm507 = vmand %vm505, %vm503
    %v508 = vsel %vm506, 1, 0
    %v509 = vsel %vm507, 1, 0
    %510 = vst [vmem:[%s2] sm:$0xff] %v508
    %511 = vst [vmem:[%s2 + $0x8] sm:$0xff] %v509
    // Predicated region
    $region14: #{tpu_custom_call.1} parent=1 // pred_check
      _
    $region15: #{tpu_custom_call.1} parent=1 // pred_check_branch
      %513 = sbr.rel (0) target = $region17
    $region16: #{tpu_custom_call.1} parent=1 // pred_region
      _
    $region17: #{tpu_custom_call.1} parent=1 // pred_fallthru
      _
    // Predicated region
    $region18: #{tpu_custom_call.1} parent=1 // pred_check
      _
    $region19: #{tpu_custom_call.1} parent=1 // pred_check_branch
      %515 = sbr.rel (0) target = $region21
    $region20: #{tpu_custom_call.1} parent=1 // pred_region
      _
    $region21: #{tpu_custom_call.1} parent=1 // pred_fallthru
      _
    %516 = vsyncpa [#allocation3], 1

// kernel: tpu_custom_call.1
$region0: #{tpu_custom_call.1}
  #allocation0 [shape = 'u32[]', space=smem, size = 0x4, offset = 0x4, fixed_abs, tag = 'smem constant byte address 0x4 - core index']
  #allocation1 [shape = 'u32[144,128]{1,0:T(1,128)}', space=vmem, size = 0x12000, scoped, tag = 'internal scratch']
  %s0 = inlined_call_operand.hbm [shape: f32[2,4,256], index: 0, kind: input, shape index: {}]
  %s1 = inlined_call_operand.vmem [shape: s32[1,256], index: 1, kind: input, shape index: {}]
  %s2 = inlined_call_operand.hbm [shape: s8[2,4,256], index: 2, kind: output, shape index: {}]
  %s3 = sld [smem:[#allocation0]]
  $region22: #{tpu_custom_call.1} parent=0
    _
  %s5 = ssub.s32 1, %s3
  %s6 = scalar_select 0, %s5, %s3
  $region1: #{tpu_custom_call.1} parent=0
    #allocation2 [shape = 'u8[8192]{0}', space=vmem, size = 0x2000, scoped, tag = 'input window, operand 0, single buffered']
    #allocation3 [shape = 's32[1]{0}', space=sflag, size = 0x4, scoped, tag = 'scoped memory for tpu_custom_call.1']
    #allocation4 [shape = 's32[1]{0}', space=sflag, size = 0x4, scoped, tag = 'scoped memory for tpu_custom_call.1']
    #allocation5 [shape = 'u8[2048]{0}', space=vmem, size = 0x800, scoped, tag = 'output window, operand 0, single buffered']
    %7 = vsyncpa [#allocation3], 0
    %8 = vsyncpa [#allocation4], 0
    // Predicated region
    $region2: #{tpu_custom_call.1} parent=1 // pred_check
      _
    $region3: #{tpu_custom_call.1} parent=1 // pred_check_branch
      %10 = sbr.rel (0) target = $region5
    $region4: #{tpu_custom_call.1} parent=1 // pred_region
      %s12 = ssub.s32 256, 256
      %13 = vsyncadd [#allocation3], %s12
      %s14 = sshll.u32 [#allocation2], 4
      %s15 = int_to_ptr.vmem [resolvable:$true] %s14
      %20 = dma.hbm_to_vmem [thread:$0]  %s0, 256, %s15, [#allocation3], 128, 128, 8
    $region5: #{tpu_custom_call.1} parent=1 // pred_fallthru
      _
    // Predicated region
    $region6: #{tpu_custom_call.1} parent=1 // pred_check
      _
    $region7: #{tpu_custom_call.1} parent=1 // pred_check_branch
      %22 = sbr.rel (0) target = $region9
    $region8: #{tpu_custom_call.1} parent=1 // pred_region
      _
    $region9: #{tpu_custom_call.1} parent=1 // pred_fallthru
      _
    // Predicated region
    $region10: #{tpu_custom_call.1} parent=1 // pred_check
      _
    $region11: #{tpu_custom_call.1} parent=1 // pred_check_branch
      %24 = sbr.rel (0) target = $region13
    $region12: #{tpu_custom_call.1} parent=1 // pred_region
      %25 = dma.done [#allocation3], 256
    $region13: #{tpu_custom_call.1} parent=1 // pred_fallthru
      _
    %v28 = vld [vmem:[#allocation2] sm:$0xff]
    %v29 = vld [vmem:[#allocation2 + $0x8] sm:$0xff]
    %v32 = vcombine.high %v28, %v28
    %v33 = vcombine.high %v29, %v29
    %vm36 = vcmask 1043456
    %v37 = vsel %vm36, %v28, -inf
    %v38 = vrot.slane %v37, 4
    %v39 = vmax.f32 %v37, %v38
    %v40 = vrot.slane %v39, 2
    %v41 = vmax.f32 %v39, %v40
    %v42 = vrot.slane %v41, 1
    %v43 = vmax.f32 %v41, %v42
    %v44 = vsel %vm36, %v32, -inf
    %v45 = vrot.slane %v44, 4
    %v46 = vmax.f32 %v44, %v45
    %v47 = vrot.slane %v46, 2
    %v48 = vmax.f32 %v46, %v47
    %v49 = vrot.slane %v48, 1
    %v50 = vmax.f32 %v48, %v49
    %v51 = vsel %vm36, %v29, -inf
    %v52 = vrot.slane %v51, 4
    %v53 = vmax.f32 %v51, %v52
    %v54 = vrot.slane %v53, 2
    %v55 = vmax.f32 %v53, %v54
    %v56 = vrot.slane %v55, 1
    %v57 = vmax.f32 %v55, %v56
    %v58 = vsel %vm36, %v33, -inf
    %v59 = vrot.slane %v58, 4
    %v60 = vmax.f32 %v58, %v59
    %v61 = vrot.slane %v60, 2
    %v62 = vmax.f32 %v60, %v61
    %v63 = vrot.slane %v62, 1
    %v64 = vmax.f32 %v62, %v63
    %v65 = vld [vmem:[%s1] sm:$0x3]
    %v70 = vcombine.low %v43, %v50
    %v71 = vcombine.low %v57, %v64
    %vm74 = vcmp.eq.f32.partialorder %v28, %v70
    %vm75 = vcmp.eq.f32.partialorder %v29, %v71
    %v76 = vlaneseq
    %v77 = vand.u32 %v76, 127
    %v78 = vadd.s32 %v77, 128
    %vm79 = vcmp.ge.s32.totalorder %v77, 16
    %vm80 = vcmp.ge.s32.totalorder %v78, 16
    %vm81 = vcmp.lt.s32.totalorder %v77, 240
    %vm82 = vcmp.lt.s32.totalorder %v78, 240
    %vm83 = vcmp.ge.s32.totalorder %v65, 1
    %vm84 = vcmp.lt.s32.totalorder %v65, 15
    %v85 = vsel %vm83, 1, 0
    %v86 = vlaneseq
    %v87 = vshrl.u32 %v86, 7
    %v88 = vsub.s32 0, %v87
    %v89 = vrot.slane %v85, %v88
    %v90 = vlaneseq
    %v91 = vshrl.u32 %v90, 7
    %v92 = vsub.s32 1, %v91
    %v93 = vrot.slane %v85, %v92
    %vm94 = vcmp.ne.s32.totalorder %v89, 0
    %vm95 = vcmp.ne.s32.totalorder %v93, 0
    %vm96 = vmand %vm79, %vm94
    %vm97 = vmand %vm80, %vm95
    %v98 = vsel %vm84, 1, 0
    %v99 = vlaneseq
    %v100 = vshrl.u32 %v99, 7
    %v101 = vsub.s32 0, %v100
    %v102 = vrot.slane %v98, %v101
    %v103 = vlaneseq
    %v104 = vshrl.u32 %v103, 7
    %v105 = vsub.s32 1, %v104
    %v106 = vrot.slane %v98, %v105
    %vm107 = vcmp.ne.s32.totalorder %v102, 0
    %vm108 = vcmp.ne.s32.totalorder %v106, 0
    %vm109 = vmand %vm79, %vm107
    %vm110 = vmand %vm80, %vm108
    %vm111 = vmand %vm81, %vm94
    %vm112 = vmand %vm82, %vm95
    %vm113 = vmand %vm81, %vm107
    %vm114 = vmand %vm82, %vm108
    %v115 = vmul.f32 %v28, -2.0
    %v116 = vmul.f32 %v29, -2.0
    %117 = vrot.lane.b32.xlu0 %v28, 16
    %v118 = vpop.permute.xlu0 %117
    %119 = vrot.lane.b32.xlu0 %v29, 16
    %v120 = vpop.permute.xlu0 %119
    %121 = vrot.lane.b32.xlu0 %v32, 16
    %v122 = vpop.permute.xlu0 %121
    %123 = vrot.lane.b32.xlu0 %v33, 16
    %v124 = vpop.permute.xlu0 %123
    %vm125 = vcmp.lt.s32.totalorder %v77, 16
    %v126 = vsel %vm125, %v118, %v122
    %v127 = vsel %vm125, %v120, %v124
    %v128 = vsel %vm125, %v122, %v118
    %v129 = vsel %vm125, %v124, %v120
    %130 = vrot.lane.b32.xlu0 %v128, 1
    %v131 = vpop.permute.xlu0 %130
    %132 = vrot.lane.b32.xlu0 %v129, 1
    %v133 = vpop.permute.xlu0 %132
    %134 = vrot.lane.b32.xlu0 %v126, 1
    %v135 = vpop.permute.xlu0 %134
    %136 = vrot.lane.b32.xlu0 %v127, 1
    %v137 = vpop.permute.xlu0 %136
    %vm138 = vcmp.lt.s32.totalorder %v77, 1
    %v139 = vsel %vm138, %v131, %v135
    %v140 = vsel %vm138, %v133, %v137
    %v141 = vsel %vm138, %v135, %v131
    %v142 = vsel %vm138, %v137, %v133
    %v143 = vsel %vm96, 1, 0
    %v144 = vsel %vm97, 1, 0
    %v145 = vlaneseq
    %v146 = vshrl.u32 %v145, 7
    %v147 = vsub.s32 0, %v146
    %v148 = vrot.slane %v143, %v147
    %v149 = vlaneseq
    %v150 = vshrl.u32 %v149, 7
    %v151 = vsub.s32 0, %v150
    %v152 = vrot.slane %v144, %v151
    %vm153 = vcmp.eq.s32.totalorder %v148, 1
    %vm154 = vcmp.eq.s32.totalorder %v152, 1
    %v155 = vsel %vm153, %v141, -inf
    %v156 = vsel %vm154, %v139, -inf
    %v157 = vsel %vm153, %v142, -inf
    %v158 = vsel %vm154, %v140, -inf
    %v163 = vcombine.low %v155, %v156
    %v164 = vcombine.low %v157, %v158
    %v167 = vmax.f32 %v28, %v163
    %v168 = vmax.f32 %v29, %v164
    %v169 = vsel %vm153, %v141, 0.0
    %v170 = vsel %vm154, %v139, 0.0
    %v171 = vsel %vm153, %v142, 0.0
    %v172 = vsel %vm154, %v140, 0.0
    %v173 = vsel %vm79, 1, 0
    %v174 = vsel %vm80, 1, 0
    %vm175 = vcmp.eq.s32.totalorder %v173, 1
    %vm176 = vcmp.eq.s32.totalorder %v174, 1
    %v177 = vsel %vm175, %v128, -inf
    %v178 = vsel %vm176, %v126, -inf
    %v179 = vsel %vm175, %v129, -inf
    %v180 = vsel %vm176, %v127, -inf
    %v185 = vcombine.low %v177, %v178
    %v186 = vcombine.low %v179, %v180
    %v189 = vmax.f32 %v167, %v185
    %v190 = vmax.f32 %v168, %v186
    %v191 = vsel %vm175, %v128, 0.0
    %v192 = vsel %vm176, %v126, 0.0
    %v193 = vsel %vm175, %v129, 0.0
    %v194 = vsel %vm176, %v127, 0.0
    %v199 = vcombine.low %v191, %v192
    %v200 = vcombine.low %v193, %v194
    %v203 = vadd.f32 %v115, %v199
    %v204 = vadd.f32 %v116, %v200
    %205 = vrot.lane.b32.xlu0 %v128, 127
    %v206 = vpop.permute.xlu0 %205
    %207 = vrot.lane.b32.xlu0 %v129, 127
    %v208 = vpop.permute.xlu0 %207
    %209 = vrot.lane.b32.xlu0 %v126, 127
    %v210 = vpop.permute.xlu0 %209
    %211 = vrot.lane.b32.xlu0 %v127, 127
    %v212 = vpop.permute.xlu0 %211
    %vm213 = vcmp.lt.s32.totalorder %v77, 127
    %v214 = vsel %vm213, %v206, %v210
    %v215 = vsel %vm213, %v208, %v212
    %v216 = vsel %vm213, %v210, %v206
    %v217 = vsel %vm213, %v212, %v208
    %v218 = vsel %vm109, 1, 0
    %v219 = vsel %vm110, 1, 0
    %v220 = vlaneseq
    %v221 = vshrl.u32 %v220, 7
    %v222 = vsub.s32 0, %v221
    %v223 = vrot.slane %v218, %v222
    %v224 = vlaneseq
    %v225 = vshrl.u32 %v224, 7
    %v226 = vsub.s32 0, %v225
    %v227 = vrot.slane %v219, %v226
    %vm228 = vcmp.eq.s32.totalorder %v223, 1
    %vm229 = vcmp.eq.s32.totalorder %v227, 1
    %v230 = vsel %vm228, %v214, -inf
    %v231 = vsel %vm229, %v216, -inf
    %v232 = vsel %vm228, %v215, -inf
    %v233 = vsel %vm229, %v217, -inf
    %v238 = vcombine.low %v230, %v231
    %v239 = vcombine.low %v232, %v233
    %v242 = vmax.f32 %v189, %v238
    %v243 = vmax.f32 %v190, %v239
    %v244 = vsel %vm228, %v214, 0.0
    %v245 = vsel %vm229, %v216, 0.0
    %v246 = vsel %vm228, %v215, 0.0
    %v247 = vsel %vm229, %v217, 0.0
    %v248 = vsub.f32 %v169, %v244
    %v249 = vsub.f32 %v170, %v245
    %v250 = vsub.f32 %v171, %v246
    %v251 = vsub.f32 %v172, %v247
    %252 = vrot.lane.b32.xlu0 %v28, 1
    %v253 = vpop.permute.xlu0 %252
    %254 = vrot.lane.b32.xlu0 %v29, 1
    %v255 = vpop.permute.xlu0 %254
    %256 = vrot.lane.b32.xlu0 %v32, 1
    %v257 = vpop.permute.xlu0 %256
    %258 = vrot.lane.b32.xlu0 %v33, 1
    %v259 = vpop.permute.xlu0 %258
    %v260 = vsel %vm138, %v253, %v257
    %v261 = vsel %vm138, %v255, %v259
    %v262 = vsel %vm138, %v257, %v253
    %v263 = vsel %vm138, %v259, %v255
    %vm264 = vcmp.eq.s32.totalorder %v89, 1
    %vm265 = vcmp.eq.s32.totalorder %v93, 1
    %v266 = vsel %vm264, %v262, -inf
    %v267 = vsel %vm265, %v260, -inf
    %v268 = vsel %vm264, %v263, -inf
    %v269 = vsel %vm265, %v261, -inf
    %v274 = vcombine.low %v266, %v267
    %v275 = vcombine.low %v268, %v269
    %v278 = vmax.f32 %v242, %v274
    %v279 = vmax.f32 %v243, %v275
    %v280 = vsel %vm264, %v262, 0.0
    %v281 = vsel %vm265, %v260, 0.0
    %v282 = vsel %vm264, %v263, 0.0
    %v283 = vsel %vm265, %v261, 0.0
    %v288 = vcombine.low %v280, %v281
    %v289 = vcombine.low %v282, %v283
    %v292 = vadd.f32 %v115, %v288
    %v293 = vadd.f32 %v116, %v289
    %294 = vrot.lane.b32.xlu0 %v28, 127
    %v295 = vpop.permute.xlu0 %294
    %296 = vrot.lane.b32.xlu0 %v29, 127
    %v297 = vpop.permute.xlu0 %296
    %298 = vrot.lane.b32.xlu0 %v32, 127
    %v299 = vpop.permute.xlu0 %298
    %300 = vrot.lane.b32.xlu0 %v33, 127
    %v301 = vpop.permute.xlu0 %300
    %v302 = vsel %vm213, %v295, %v299
    %v303 = vsel %vm213, %v297, %v301
    %v304 = vsel %vm213, %v299, %v295
    %v305 = vsel %vm213, %v301, %v297
    %vm306 = vcmp.eq.s32.totalorder %v102, 1
    %vm307 = vcmp.eq.s32.totalorder %v106, 1
    %v308 = vsel %vm306, %v302, -inf
    %v309 = vsel %vm307, %v304, -inf
    %v310 = vsel %vm306, %v303, -inf
    %v311 = vsel %vm307, %v305, -inf
    %v316 = vcombine.low %v308, %v309
    %v317 = vcombine.low %v310, %v311
    %v320 = vmax.f32 %v278, %v316
    %v321 = vmax.f32 %v279, %v317
    %v322 = vsel %vm306, %v302, 0.0
    %v323 = vsel %vm307, %v304, 0.0
    %v324 = vsel %vm306, %v303, 0.0
    %v325 = vsel %vm307, %v305, 0.0
    %v330 = vcombine.low %v322, %v323
    %v331 = vcombine.low %v324, %v325
    %v334 = vadd.f32 %v292, %v330
    %v335 = vadd.f32 %v293, %v331
    %336 = vrot.lane.b32.xlu0 %v28, 112
    %v337 = vpop.permute.xlu0 %336
    %338 = vrot.lane.b32.xlu0 %v29, 112
    %v339 = vpop.permute.xlu0 %338
    %340 = vrot.lane.b32.xlu0 %v32, 112
    %v341 = vpop.permute.xlu0 %340
    %342 = vrot.lane.b32.xlu0 %v33, 112
    %v343 = vpop.permute.xlu0 %342
    %vm344 = vcmp.lt.s32.totalorder %v77, 112
    %v345 = vsel %vm344, %v337, %v341
    %v346 = vsel %vm344, %v339, %v343
    %v347 = vsel %vm344, %v341, %v337
    %v348 = vsel %vm344, %v343, %v339
    %349 = vrot.lane.b32.xlu0 %v345, 1
    %v350 = vpop.permute.xlu0 %349
    %351 = vrot.lane.b32.xlu0 %v346, 1
    %v352 = vpop.permute.xlu0 %351
    %353 = vrot.lane.b32.xlu0 %v347, 1
    %v354 = vpop.permute.xlu0 %353
    %355 = vrot.lane.b32.xlu0 %v348, 1
    %v356 = vpop.permute.xlu0 %355
    %v357 = vsel %vm138, %v350, %v354
    %v358 = vsel %vm138, %v352, %v356
    %v359 = vsel %vm138, %v354, %v350
    %v360 = vsel %vm138, %v356, %v352
    %v361 = vsel %vm111, 1, 0
    %v362 = vsel %vm112, 1, 0
    %v363 = vlaneseq
    %v364 = vshrl.u32 %v363, 7
    %v365 = vsub.s32 0, %v364
    %v366 = vrot.slane %v361, %v365
    %v367 = vlaneseq
    %v368 = vshrl.u32 %v367, 7
    %v369 = vsub.s32 0, %v368
    %v370 = vrot.slane %v362, %v369
    %vm371 = vcmp.eq.s32.totalorder %v366, 1
    %vm372 = vcmp.eq.s32.totalorder %v370, 1
    %v373 = vsel %vm371, %v359, -inf
    %v374 = vsel %vm372, %v357, -inf
    %v375 = vsel %vm371, %v360, -inf
    %v376 = vsel %vm372, %v358, -inf
    %v381 = vcombine.low %v373, %v374
    %v382 = vcombine.low %v375, %v376
    %v385 = vmax.f32 %v320, %v381
    %v386 = vmax.f32 %v321, %v382
    %v387 = vsel %vm371, %v359, 0.0
    %v388 = vsel %vm372, %v357, 0.0
    %v389 = vsel %vm371, %v360, 0.0
    %v390 = vsel %vm372, %v358, 0.0
    %v391 = vsub.f32 %v248, %v387
    %v392 = vsub.f32 %v249, %v388
    %v393 = vsub.f32 %v250, %v389
    %v394 = vsub.f32 %v251, %v390
    %v395 = vsel %vm81, 1, 0
    %v396 = vsel %vm82, 1, 0
    %vm397 = vcmp.eq.s32.totalorder %v395, 1
    %vm398 = vcmp.eq.s32.totalorder %v396, 1
    %v399 = vsel %vm397, %v345, -inf
    %v400 = vsel %vm398, %v347, -inf
    %v401 = vsel %vm397, %v346, -inf
    %v402 = vsel %vm398, %v348, -inf
    %v407 = vcombine.low %v399, %v400
    %v408 = vcombine.low %v401, %v402
    %v411 = vmax.f32 %v385, %v407
    %v412 = vmax.f32 %v386, %v408
    %v413 = vsel %vm397, %v345, 0.0
    %v414 = vsel %vm398, %v347, 0.0
    %v415 = vsel %vm397, %v346, 0.0
    %v416 = vsel %vm398, %v348, 0.0
    %v421 = vcombine.low %v413, %v414
    %v422 = vcombine.low %v415, %v416
    %v425 = vadd.f32 %v203, %v421
    %v426 = vadd.f32 %v204, %v422
    %427 = vrot.lane.b32.xlu0 %v345, 127
    %v428 = vpop.permute.xlu0 %427
    %429 = vrot.lane.b32.xlu0 %v346, 127
    %v430 = vpop.permute.xlu0 %429
    %431 = vrot.lane.b32.xlu0 %v347, 127
    %v432 = vpop.permute.xlu0 %431
    %433 = vrot.lane.b32.xlu0 %v348, 127
    %v434 = vpop.permute.xlu0 %433
    %v435 = vsel %vm213, %v428, %v432
    %v436 = vsel %vm213, %v430, %v434
    %v437 = vsel %vm213, %v432, %v428
    %v438 = vsel %vm213, %v434, %v430
    %v439 = vsel %vm113, 1, 0
    %v440 = vsel %vm114, 1, 0
    %v441 = vlaneseq
    %v442 = vshrl.u32 %v441, 7
    %v443 = vsub.s32 0, %v442
    %v444 = vrot.slane %v439, %v443
    %v445 = vlaneseq
    %v446 = vshrl.u32 %v445, 7
    %v447 = vsub.s32 0, %v446
    %v448 = vrot.slane %v440, %v447
    %vm449 = vcmp.eq.s32.totalorder %v444, 1
    %vm450 = vcmp.eq.s32.totalorder %v448, 1
    %v451 = vsel %vm449, %v435, -inf
    %v452 = vsel %vm450, %v437, -inf
    %v453 = vsel %vm449, %v436, -inf
    %v454 = vsel %vm450, %v438, -inf
    %v459 = vcombine.low %v451, %v452
    %v460 = vcombine.low %v453, %v454
    %v463 = vmax.f32 %v411, %v459
    %v464 = vmax.f32 %v412, %v460
    %v465 = vsel %vm449, %v435, 0.0
    %v466 = vsel %vm450, %v437, 0.0
    %v467 = vsel %vm449, %v436, 0.0
    %v468 = vsel %vm450, %v438, 0.0
    %v469 = vadd.f32 %v391, %v465
    %v470 = vadd.f32 %v392, %v466
    %v471 = vadd.f32 %v393, %v467
    %v472 = vadd.f32 %v394, %v468
    %vm473 = vcmp.eq.f32.partialorder %v28, %v463
    %vm474 = vcmp.eq.f32.partialorder %v29, %v464
    %v475 = vmul.f32 %v469, 0.25
    %v476 = vmul.f32 %v470, 0.25
    %v477 = vmul.f32 %v471, 0.25
    %v478 = vmul.f32 %v472, 0.25
    %v479 = vmul.f32 %v425, %v334
    %v480 = vmul.f32 %v426, %v335
    %v481 = vmul.f32 %v475, %v475
    %v482 = vmul.f32 %v476, %v476
    %v483 = vmul.f32 %v477, %v477
    %v484 = vmul.f32 %v478, %v478
    %v489 = vcombine.low %v481, %v482
    %v490 = vcombine.low %v483, %v484
    %v493 = vsub.f32 %v479, %v489
    %v494 = vsub.f32 %v480, %v490
    %v495 = vadd.f32 %v425, %v334
    %v496 = vadd.f32 %v426, %v335
    %v497 = vmul.f32 %v495, %v495
    %v498 = vmul.f32 %v496, %v496
    %v499 = vmul.f32 %v493, 7.2
    %v500 = vmul.f32 %v494, 7.2
    %vm501 = vcmp.le.f32.partialorder %v497, %v499
    %vm502 = vcmp.le.f32.partialorder %v498, %v500
    %vm503 = vcmp.gt.f32.partialorder %v493, 0.0
    %vm504 = vcmp.gt.f32.partialorder %v494, 0.0
    %vm505 = vmand %vm501, %vm503
    %vm506 = vmand %vm502, %vm504
    %vm507 = vmand %vm74, %vm473
    %vm508 = vmand %vm75, %vm474
    %vm509 = vmand %vm507, %vm505
    %vm510 = vmand %vm508, %vm506
    %v511 = vsel %vm509, 1, 0
    %v512 = vsel %vm510, 1, 0
    %v513 = vpack.c.b16 %v511, %v511
    %v514 = vpack.c.b8 %v513, %v513
    %v515 = vpack.c.b16 %v512, %v512
    %v516 = vpack.c.b8 %v515, %v515
    %vm517 = vnez %v514
    %vm518 = vnez %v516
    %v519 = vsel %vm517, 16843009, 0
    %v520 = vsel %vm518, 16843009, 0
    %v522 = vunpack.c.l.s4 1966171168
    %v523 = vunpack.c.0.s8 %v522
    %v524 = vlaneseq
    %v525 = vshrl.u32 %v524, 7
    %v526 = vsub.s32 %v523, %v525
    %v527 = vrot.slane %v519, %v526
    %v528 = vcombine.high %v527, %v527
    %v530 = vunpack.c.l.s4 1966171168
    %v531 = vunpack.c.0.s8 %v530
    %v532 = vlaneseq
    %v533 = vshrl.u32 %v532, 7
    %v534 = vsub.s32 %v531, %v533
    %v535 = vrot.slane %v527, %v534
    %v537 = vunpack.c.l.s4 1966171168
    %v538 = vunpack.c.0.s8 %v537
    %v539 = vlaneseq
    %v540 = vshrl.u32 %v539, 7
    %v541 = vsub.s32 %v538, %v540
    %v542 = vrot.slane %v528, %v541
    %v544 = vunpack.c.l.s4 1966171168
    %v545 = vunpack.c.0.s8 %v544
    %v546 = vlaneseq
    %v547 = vshrl.u32 %v546, 7
    %v548 = vsub.s32 %v545, %v547
    %v549 = vrot.slane %v520, %v548
    %v550 = vcombine.high %v549, %v549
    %v552 = vunpack.c.l.s4 1966171168
    %v553 = vunpack.c.0.s8 %v552
    %v554 = vlaneseq
    %v555 = vshrl.u32 %v554, 7
    %v556 = vsub.s32 %v553, %v555
    %v557 = vrot.slane %v549, %v556
    %v559 = vunpack.c.l.s4 1966171168
    %v560 = vunpack.c.0.s8 %v559
    %v561 = vlaneseq
    %v562 = vshrl.u32 %v561, 7
    %v563 = vsub.s32 %v560, %v562
    %v564 = vrot.slane %v550, %v563
    %vm565 = vnez %v535
    %vm566 = vnez %v542
    %vm567 = vnez %v557
    %vm568 = vnez %v564
    %v569 = vsel %vm565, 16843009, 0
    %v570 = vsel %vm566, 16843009, 0
    %v571 = vsel %vm567, 16843009, 0
    %v572 = vsel %vm568, 16843009, 0
    %v573 = vcombine.low %v569, %v570
    %v575 = vunpack.c.l.s4 1966171168
    %v576 = vunpack.c.0.s8 %v575
    %v577 = vlaneseq
    %v578 = vshrl.u32 %v577, 7
    %v579 = vsub.s32 %v576, %v578
    %v580 = vrot.slane %v573, %v579
    %v582 = vunpack.c.l.s4 1966171168
    %v583 = vunpack.c.0.s8 %v582
    %v584 = vlaneseq
    %v585 = vshrl.u32 %v584, 7
    %v586 = vsub.s32 %v583, %v585
    %v587 = vrot.slane %v580, %v586
    %v588 = vcombine.low %v571, %v572
    %v590 = vunpack.c.l.s4 1966171168
    %v591 = vunpack.c.0.s8 %v590
    %v592 = vlaneseq
    %v593 = vshrl.u32 %v592, 7
    %v594 = vsub.s32 %v591, %v593
    %v595 = vrot.slane %v588, %v594
    %v597 = vunpack.c.l.s4 1966171168
    %v598 = vunpack.c.0.s8 %v597
    %v599 = vlaneseq
    %v600 = vshrl.u32 %v599, 7
    %v601 = vsub.s32 %v598, %v600
    %v602 = vrot.slane %v595, %v601
    %603 = vst [vmem:[#allocation5] sm:$0x3] %v587
    %604 = vst [vmem:[#allocation5 + $0x2] sm:$0x3] %v602
    // Predicated region
    $region14: #{tpu_custom_call.1} parent=1 // pred_check
      _
    $region15: #{tpu_custom_call.1} parent=1 // pred_check_branch
      %606 = sbr.rel (0) target = $region17
    $region16: #{tpu_custom_call.1} parent=1 // pred_region
      %s608 = ssub.s32 64, 64
      %609 = vsyncadd [#allocation4], %s608
      %s610 = sshll.u32 [#allocation5], 4
      %s611 = int_to_ptr.vmem [resolvable:$true] %s610
      %616 = dma.vmem_to_hbm [thread:$0]  %s611, 64, %s2, [#allocation4], 32, 32, 2
    $region17: #{tpu_custom_call.1} parent=1 // pred_fallthru
      _
    // Predicated region
    $region18: #{tpu_custom_call.1} parent=1 // pred_check
      _
    $region19: #{tpu_custom_call.1} parent=1 // pred_check_branch
      %618 = sbr.rel (0) target = $region21
    $region20: #{tpu_custom_call.1} parent=1 // pred_region
      %619 = dma.done [#allocation4], 64
    $region21: #{tpu_custom_call.1} parent=1 // pred_fallthru
      _
    %620 = vsyncpa [#allocation3], 1
    %621 = vsyncpa [#allocation4], 1

</llo_original>
